<compile_context>
chip_gen: v7x
topology: tpu7x:2x2x1
jax: 0.10.0
libtpu: 0.0.40
codegen_flags: <defaults>
</compile_context>

<pallas_src>
import jax
import jax.numpy as jnp
from jax import lax
from jax.experimental import pallas as pl
from jax.experimental.pallas import tpu as pltpu


def _make_bilstm_kernel(T, B, H):
    G = 4 * H

    def kernel(x_ref, wih_ref, b_ref, whh_f_ref, whh_b_ref, out_ref, hn_ref):
        # --- One batched input-hidden projection for the whole sequence and
        # --- both directions: (T*B, E) @ (E, 8H) + (1, 8H).  Off the
        # --- recurrent critical path; fills T*B MXU rows instead of B.
        g_all = (jnp.dot(x_ref[...], wih_ref[...],
                         preferred_element_type=jnp.float32) + b_ref[...])

        # Hoist weight loads out of the time loop.
        whh_f = whh_f_ref[...]
        whh_b = whh_b_ref[...]

        def lstm_cell(gates, c):
            # PyTorch gate order: i, f, g, o.  Two full-tile transcendental
            # launches, then static lane slices.
            sg = jax.nn.sigmoid(gates)
            tg = jnp.tanh(gates)
            i = sg[:, 0 * H:1 * H]
            f = sg[:, 1 * H:2 * H]
            g = tg[:, 2 * H:3 * H]
            o = sg[:, 3 * H:4 * H]
            c_new = f * c + i * g
            h_new = o * jnp.tanh(c_new)
            return h_new, c_new

        zeros = jnp.zeros((B, H), jnp.float32)
        h_f, c_f, h_b, c_b = zeros, zeros, zeros, zeros

        # Time loop, fully unrolled at trace time (static T) -> static indices.
        for t in range(T):
            rt = T - 1 - t
            gates_f = g_all[t * B:(t + 1) * B, 0:G] + jnp.dot(
                h_f, whh_f, preferred_element_type=jnp.float32)
            gates_b = g_all[rt * B:(rt + 1) * B, G:2 * G] + jnp.dot(
                h_b, whh_b, preferred_element_type=jnp.float32)

            h_f, c_f = lstm_cell(gates_f, c_f)
            h_b, c_b = lstm_cell(gates_b, c_b)

            # Batch-first output slab, written in VMEM; single writeback DMA
            # at kernel end.
            out_ref[:, t, 0:H] = h_f
            out_ref[:, rt, H:2 * H] = h_b

        # Final hidden written exactly once.
        hn_ref[0] = h_f
        hn_ref[1] = h_b

    return kernel


def bilstm_pallas(x_flat, wih_cat, b_cat, whh_f, whh_b, *, T, B, E, H):
    """x_flat: (T*B, E) time-major-flattened embeddings.
    Returns outputs (B, T, 2H) and final hidden (2, B, H)."""
    kernel = _make_bilstm_kernel(T, B, H)
    vmem = pl.BlockSpec(memory_space=pltpu.MemorySpace.VMEM)

    flops = 2 * T * B * (E + H) * 8 * H            # ih + hh matmuls
    transcendentals = 9 * T * B * 2 * H            # sigmoid/tanh tiles + tanh(c)
    bytes_accessed = 4 * (x_flat.size + wih_cat.size + b_cat.size
                          + whh_f.size + whh_b.size
                          + T * B * 2 * H + 2 * B * H)

    return pl.pallas_call(
        kernel,
        out_shape=(
            jax.ShapeDtypeStruct((B, T, 2 * H), jnp.float32),
            jax.ShapeDtypeStruct((2, B, H), jnp.float32),
        ),
        in_specs=[vmem, vmem, vmem, vmem, vmem],
        out_specs=(vmem, vmem),
        cost_estimate=pl.CostEstimate(flops=flops,
                                      transcendentals=transcendentals,
                                      bytes_accessed=bytes_accessed),
    )(x_flat, wih_cat, b_cat, whh_f, whh_b)


def init_params(key, input_size, emb_size, hidden_size, padding_idx):
    ks = jax.random.split(key, 9)
    H = hidden_size
    scale = 1.0 / jnp.sqrt(jnp.float32(H))

    emb = jax.random.normal(ks[0], (input_size, emb_size), jnp.float32)
    emb = emb.at[padding_idx].set(0.0)  # padding_idx row is zero

    def u(k, shape):
        return jax.random.uniform(k, shape, jnp.float32, -scale, scale)

    return {
        "embedding": emb,
        # forward direction (weights stored transposed for x @ W)
        "wih_f": u(ks[1], (emb_size, 4 * H)),
        "whh_f": u(ks[2], (H, 4 * H)),
        "b_f": u(ks[3], (1, 4 * H)) + u(ks[4], (1, 4 * H)),  # b_ih + b_hh
        # backward direction
        "wih_b": u(ks[5], (emb_size, 4 * H)),
        "whh_b": u(ks[6], (H, 4 * H)),
        "b_b": u(ks[7], (1, 4 * H)) + u(ks[8], (1, 4 * H)),
    }


def encoder_rnn_forward(seqIn, params):
    """seqIn: (B, T) int32.  Returns (outputs (B, T, 2H), hidden (2, B, H))."""
    B, T = seqIn.shape
    E = params["embedding"].shape[1]
    H = params["whh_f"].shape[0]

    # Transpose the tiny (B, T) int index array (not the activations) so the
    # embedding gather comes out time-major directly.
    emb = params["embedding"][seqIn.T]                # (T, B, E)
    # TODO(synk): nn.Dropout is identity in eval mode; training-mode dropout not applied.
    x_flat = emb.reshape(T * B, E)                    # time-major flatten

    wih_cat = jnp.concatenate([params["wih_f"], params["wih_b"]], axis=1)  # (E, 8H)
    b_cat = jnp.concatenate([params["b_f"], params["b_b"]], axis=1)        # (1, 8H)

    outputs, hidden = bilstm_pallas(
        x_flat, wih_cat, b_cat, params["whh_f"], params["whh_b"],
        T=T, B=B, E=E, H=H)
    return outputs, hidden


def _reference_forward(seqIn, params):
    """Pure-JAX reference (lax.scan) for correctness checking."""
    embedded = params["embedding"][seqIn]
    x = jnp.transpose(embedded, (1, 0, 2))  # (T, B, E)
    T, B, _ = x.shape
    H = params["whh_f"].shape[0]

    def make_step(wih, whh, b):
        def step(carry, xt):
            h, c = carry
            gates = xt @ wih + h @ whh + b
            i = jax.nn.sigmoid(gates[:, 0 * H:1 * H])
            f = jax.nn.sigmoid(gates[:, 1 * H:2 * H])
            g = jnp.tanh(gates[:, 2 * H:3 * H])
            o = jax.nn.sigmoid(gates[:, 3 * H:4 * H])
            c = f * c + i * g
            h = o * jnp.tanh(c)
            return (h, c), h
        return step

    zeros = (jnp.zeros((B, H), jnp.float32), jnp.zeros((B, H), jnp.float32))
    (hf, _), out_f = lax.scan(
        make_step(params["wih_f"], params["whh_f"], params["b_f"]), zeros, x)
    (hb, _), out_b_rev = lax.scan(
        make_step(params["wih_b"], params["whh_b"], params["b_b"]), zeros, x[::-1])
    out_b = out_b_rev[::-1]
    outputs = jnp.concatenate([out_f, out_b], axis=-1)
    outputs = jnp.transpose(outputs, (1, 0, 2))
    hidden = jnp.stack([hf, hb], axis=0)
    return outputs, hidden


if __name__ == "__main__":
    # Small shapes consistent with the module.
    input_size = 50     # vocab
    emb_size = 32
    hidden_size = 32
    padding_idx = 0
    B, T = 2, 8

    key = jax.random.PRNGKey(0)
    kp, kd = jax.random.split(key)
    params = init_params(kp, input_size, emb_size, hidden_size, padding_idx)
    seqIn = jax.random.randint(kd, (B, T), 0, input_size, dtype=jnp.int32)

    fwd = jax.jit(encoder_rnn_forward)
    outputs, hidden = fwd(seqIn, params)
    jax.block_until_ready((outputs, hidden))

    ref_out, ref_hid = _reference_forward(seqIn, params)
    assert outputs.shape == (B, T, 2 * hidden_size)
    assert hidden.shape == (2, B, hidden_size)
    assert jnp.allclose(outputs, ref_out, atol=5e-5, rtol=5e-5)
    assert jnp.allclose(hidden, ref_hid, atol=5e-5, rtol=5e-5)

    print("KERNEL_OK")
</pallas_src>

<mosaic_0001>
module attributes {stable_mosaic.version = 11 : i64} {
  func.func @kernel(%arg0: memref<16x32xf32, #tpu.memory_space<vmem>>, %arg1: memref<32x256xf32, #tpu.memory_space<vmem>>, %arg2: memref<1x256xf32, #tpu.memory_space<vmem>>, %arg3: memref<32x128xf32, #tpu.memory_space<vmem>>, %arg4: memref<32x128xf32, #tpu.memory_space<vmem>>, %arg5: memref<2x8x64xf32, #tpu.memory_space<vmem>>, %arg6: memref<2x2x32xf32, #tpu.memory_space<vmem>>) attributes {dimension_semantics = [], scalar_prefetch = 0 : i64, scratch_operands = 0 : i64, tpu.core_type = #tpu.core_type<tc>} {
    %c0 = arith.constant 0 : index
    %c0_0 = arith.constant 0 : index
    %0 = vector.load %arg0[%c0, %c0_0] : memref<16x32xf32, #tpu.memory_space<vmem>>, vector<16x32xf32>
    %c0_1 = arith.constant 0 : index
    %c0_2 = arith.constant 0 : index
    %1 = vector.load %arg1[%c0_1, %c0_2] : memref<32x256xf32, #tpu.memory_space<vmem>>, vector<32x256xf32>
    %cst = arith.constant dense<0.000000e+00> : vector<16x256xf32>
    %2 = tpu.matmul %0, %1, %cst {dimension_numbers = #tpu.dot_dimension_numbers<[1], [0], [0], [1], [0, 0, 1, 1], [], []>} : vector<16x32xf32>, vector<32x256xf32>, vector<16x256xf32> -> vector<16x256xf32>
    %c0_3 = arith.constant 0 : index
    %c0_4 = arith.constant 0 : index
    %3 = vector.load %arg2[%c0_3, %c0_4] : memref<1x256xf32, #tpu.memory_space<vmem>>, vector<1x256xf32>
    %4 = vector.broadcast %3 : vector<1x256xf32> to vector<16x256xf32>
    %5 = arith.addf %2, %4 : vector<16x256xf32>
    %c0_5 = arith.constant 0 : index
    %c0_6 = arith.constant 0 : index
    %6 = vector.load %arg3[%c0_5, %c0_6] : memref<32x128xf32, #tpu.memory_space<vmem>>, vector<32x128xf32>
    %c0_7 = arith.constant 0 : index
    %c0_8 = arith.constant 0 : index
    %7 = vector.load %arg4[%c0_7, %c0_8] : memref<32x128xf32, #tpu.memory_space<vmem>>, vector<32x128xf32>
    %cst_9 = arith.constant 0.000000e+00 : f32
    %8 = vector.broadcast %cst_9 : f32 to vector<2x32xf32>
    %9 = vector.extract_strided_slice %5 {offsets = [0, 0], sizes = [2, 128], strides = [1, 1]} : vector<16x256xf32> to vector<2x128xf32>
    %cst_10 = arith.constant dense<0.000000e+00> : vector<2x128xf32>
    %10 = tpu.matmul %8, %6, %cst_10 {dimension_numbers = #tpu.dot_dimension_numbers<[1], [0], [0], [1], [0, 0, 1, 1], [], []>} : vector<2x32xf32>, vector<32x128xf32>, vector<2x128xf32> -> vector<2x128xf32>
    %11 = arith.addf %9, %10 : vector<2x128xf32>
    %12 = vector.extract_strided_slice %5 {offsets = [14, 128], sizes = [2, 128], strides = [1, 1]} : vector<16x256xf32> to vector<2x128xf32>
    %cst_11 = arith.constant dense<0.000000e+00> : vector<2x128xf32>
    %13 = tpu.matmul %8, %7, %cst_11 {dimension_numbers = #tpu.dot_dimension_numbers<[1], [0], [0], [1], [0, 0, 1, 1], [], []>} : vector<2x32xf32>, vector<32x128xf32>, vector<2x128xf32> -> vector<2x128xf32>
    %14 = arith.addf %12, %13 : vector<2x128xf32>
    %15 = arith.negf %11 : vector<2x128xf32>
    %16 = math.exp %15 : vector<2x128xf32>
    %cst_12 = arith.constant 1.000000e+00 : f32
    %17 = vector.broadcast %cst_12 : f32 to vector<2x128xf32>
    %18 = arith.addf %17, %16 : vector<2x128xf32>
    %19 = arith.divf %17, %18 : vector<2x128xf32>
    %20 = math.tanh %11 : vector<2x128xf32>
    %21 = vector.extract_strided_slice %19 {offsets = [0, 0], sizes = [2, 32], strides = [1, 1]} : vector<2x128xf32> to vector<2x32xf32>
    %22 = vector.extract_strided_slice %19 {offsets = [0, 32], sizes = [2, 32], strides = [1, 1]} : vector<2x128xf32> to vector<2x32xf32>
    %23 = vector.extract_strided_slice %20 {offsets = [0, 64], sizes = [2, 32], strides = [1, 1]} : vector<2x128xf32> to vector<2x32xf32>
    %24 = vector.extract_strided_slice %19 {offsets = [0, 96], sizes = [2, 32], strides = [1, 1]} : vector<2x128xf32> to vector<2x32xf32>
    %25 = arith.mulf %22, %8 : vector<2x32xf32>
    %26 = arith.mulf %21, %23 : vector<2x32xf32>
    %27 = arith.addf %25, %26 : vector<2x32xf32>
    %28 = math.tanh %27 : vector<2x32xf32>
    %29 = arith.mulf %24, %28 : vector<2x32xf32>
    %30 = arith.negf %14 : vector<2x128xf32>
    %31 = math.exp %30 : vector<2x128xf32>
    %cst_13 = arith.constant 1.000000e+00 : f32
    %32 = vector.broadcast %cst_13 : f32 to vector<2x128xf32>
    %33 = arith.addf %32, %31 : vector<2x128xf32>
    %34 = arith.divf %32, %33 : vector<2x128xf32>
    %35 = math.tanh %14 : vector<2x128xf32>
    %36 = vector.extract_strided_slice %34 {offsets = [0, 0], sizes = [2, 32], strides = [1, 1]} : vector<2x128xf32> to vector<2x32xf32>
    %37 = vector.extract_strided_slice %34 {offsets = [0, 32], sizes = [2, 32], strides = [1, 1]} : vector<2x128xf32> to vector<2x32xf32>
    %38 = vector.extract_strided_slice %35 {offsets = [0, 64], sizes = [2, 32], strides = [1, 1]} : vector<2x128xf32> to vector<2x32xf32>
    %39 = vector.extract_strided_slice %34 {offsets = [0, 96], sizes = [2, 32], strides = [1, 1]} : vector<2x128xf32> to vector<2x32xf32>
    %40 = arith.mulf %37, %8 : vector<2x32xf32>
    %41 = arith.mulf %36, %38 : vector<2x32xf32>
    %42 = arith.addf %40, %41 : vector<2x32xf32>
    %43 = math.tanh %42 : vector<2x32xf32>
    %44 = arith.mulf %39, %43 : vector<2x32xf32>
    %c0_14 = arith.constant 0 : index
    %c0_15 = arith.constant 0 : index
    %c0_16 = arith.constant 0 : index
    %45 = vector.load %arg5[%c0_14, %c0_15, %c0_16] : memref<2x8x64xf32, #tpu.memory_space<vmem>>, vector<2x1x32xf32>
    %46 = vector.shape_cast %45 : vector<2x1x32xf32> to vector<2x32xf32>
    %47 = vector.shape_cast %29 : vector<2x32xf32> to vector<2x1x32xf32>
    tpu.vector_store %arg5[%c0_14, %c0_15, %c0_16], %47 {strides = array<i32>} : memref<2x8x64xf32, #tpu.memory_space<vmem>>, vector<2x1x32xf32>,
    %c0_17 = arith.constant 0 : index
    %c7 = arith.constant 7 : index
    %c32 = arith.constant 32 : index
    %48 = vector.load %arg5[%c0_17, %c7, %c32] : memref<2x8x64xf32, #tpu.memory_space<vmem>>, vector<2x1x32xf32>
    %49 = vector.shape_cast %48 : vector<2x1x32xf32> to vector<2x32xf32>
    %50 = vector.shape_cast %44 : vector<2x32xf32> to vector<2x1x32xf32>
    tpu.vector_store %arg5[%c0_17, %c7, %c32], %50 {strides = array<i32>} : memref<2x8x64xf32, #tpu.memory_space<vmem>>, vector<2x1x32xf32>,
    %51 = vector.extract_strided_slice %5 {offsets = [2, 0], sizes = [2, 128], strides = [1, 1]} : vector<16x256xf32> to vector<2x128xf32>
    %cst_18 = arith.constant dense<0.000000e+00> : vector<2x128xf32>
    %52 = tpu.matmul %29, %6, %cst_18 {dimension_numbers = #tpu.dot_dimension_numbers<[1], [0], [0], [1], [0, 0, 1, 1], [], []>} : vector<2x32xf32>, vector<32x128xf32>, vector<2x128xf32> -> vector<2x128xf32>
    %53 = arith.addf %51, %52 : vector<2x128xf32>
    %54 = vector.extract_strided_slice %5 {offsets = [12, 128], sizes = [2, 128], strides = [1, 1]} : vector<16x256xf32> to vector<2x128xf32>
    %cst_19 = arith.constant dense<0.000000e+00> : vector<2x128xf32>
    %55 = tpu.matmul %44, %7, %cst_19 {dimension_numbers = #tpu.dot_dimension_numbers<[1], [0], [0], [1], [0, 0, 1, 1], [], []>} : vector<2x32xf32>, vector<32x128xf32>, vector<2x128xf32> -> vector<2x128xf32>
    %56 = arith.addf %54, %55 : vector<2x128xf32>
    %57 = arith.negf %53 : vector<2x128xf32>
    %58 = math.exp %57 : vector<2x128xf32>
    %cst_20 = arith.constant 1.000000e+00 : f32
    %59 = vector.broadcast %cst_20 : f32 to vector<2x128xf32>
    %60 = arith.addf %59, %58 : vector<2x128xf32>
    %61 = arith.divf %59, %60 : vector<2x128xf32>
    %62 = math.tanh %53 : vector<2x128xf32>
    %63 = vector.extract_strided_slice %61 {offsets = [0, 0], sizes = [2, 32], strides = [1, 1]} : vector<2x128xf32> to vector<2x32xf32>
    %64 = vector.extract_strided_slice %61 {offsets = [0, 32], sizes = [2, 32], strides = [1, 1]} : vector<2x128xf32> to vector<2x32xf32>
    %65 = vector.extract_strided_slice %62 {offsets = [0, 64], sizes = [2, 32], strides = [1, 1]} : vector<2x128xf32> to vector<2x32xf32>
    %66 = vector.extract_strided_slice %61 {offsets = [0, 96], sizes = [2, 32], strides = [1, 1]} : vector<2x128xf32> to vector<2x32xf32>
    %67 = arith.mulf %64, %27 : vector<2x32xf32>
    %68 = arith.mulf %63, %65 : vector<2x32xf32>
    %69 = arith.addf %67, %68 : vector<2x32xf32>
    %70 = math.tanh %69 : vector<2x32xf32>
    %71 = arith.mulf %66, %70 : vector<2x32xf32>
    %72 = arith.negf %56 : vector<2x128xf32>
    %73 = math.exp %72 : vector<2x128xf32>
    %cst_21 = arith.constant 1.000000e+00 : f32
    %74 = vector.broadcast %cst_21 : f32 to vector<2x128xf32>
    %75 = arith.addf %74, %73 : vector<2x128xf32>
    %76 = arith.divf %74, %75 : vector<2x128xf32>
    %77 = math.tanh %56 : vector<2x128xf32>
    %78 = vector.extract_strided_slice %76 {offsets = [0, 0], sizes = [2, 32], strides = [1, 1]} : vector<2x128xf32> to vector<2x32xf32>
    %79 = vector.extract_strided_slice %76 {offsets = [0, 32], sizes = [2, 32], strides = [1, 1]} : vector<2x128xf32> to vector<2x32xf32>
    %80 = vector.extract_strided_slice %77 {offsets = [0, 64], sizes = [2, 32], strides = [1, 1]} : vector<2x128xf32> to vector<2x32xf32>
    %81 = vector.extract_strided_slice %76 {offsets = [0, 96], sizes = [2, 32], strides = [1, 1]} : vector<2x128xf32> to vector<2x32xf32>
    %82 = arith.mulf %79, %42 : vector<2x32xf32>
    %83 = arith.mulf %78, %80 : vector<2x32xf32>
    %84 = arith.addf %82, %83 : vector<2x32xf32>
    %85 = math.tanh %84 : vector<2x32xf32>
    %86 = arith.mulf %81, %85 : vector<2x32xf32>
    %c0_22 = arith.constant 0 : index
    %c1 = arith.constant 1 : index
    %c0_23 = arith.constant 0 : index
    %87 = vector.load %arg5[%c0_22, %c1, %c0_23] : memref<2x8x64xf32, #tpu.memory_space<vmem>>, vector<2x1x32xf32>
    %88 = vector.shape_cast %87 : vector<2x1x32xf32> to vector<2x32xf32>
    %89 = vector.shape_cast %71 : vector<2x32xf32> to vector<2x1x32xf32>
    tpu.vector_store %arg5[%c0_22, %c1, %c0_23], %89 {strides = array<i32>} : memref<2x8x64xf32, #tpu.memory_space<vmem>>, vector<2x1x32xf32>,
    %c0_24 = arith.constant 0 : index
    %c6 = arith.constant 6 : index
    %c32_25 = arith.constant 32 : index
    %90 = vector.load %arg5[%c0_24, %c6, %c32_25] : memref<2x8x64xf32, #tpu.memory_space<vmem>>, vector<2x1x32xf32>
    %91 = vector.shape_cast %90 : vector<2x1x32xf32> to vector<2x32xf32>
    %92 = vector.shape_cast %86 : vector<2x32xf32> to vector<2x1x32xf32>
    tpu.vector_store %arg5[%c0_24, %c6, %c32_25], %92 {strides = array<i32>} : memref<2x8x64xf32, #tpu.memory_space<vmem>>, vector<2x1x32xf32>,
    %93 = vector.extract_strided_slice %5 {offsets = [4, 0], sizes = [2, 128], strides = [1, 1]} : vector<16x256xf32> to vector<2x128xf32>
    %cst_26 = arith.constant dense<0.000000e+00> : vector<2x128xf32>
    %94 = tpu.matmul %71, %6, %cst_26 {dimension_numbers = #tpu.dot_dimension_numbers<[1], [0], [0], [1], [0, 0, 1, 1], [], []>} : vector<2x32xf32>, vector<32x128xf32>, vector<2x128xf32> -> vector<2x128xf32>
    %95 = arith.addf %93, %94 : vector<2x128xf32>
    %96 = vector.extract_strided_slice %5 {offsets = [10, 128], sizes = [2, 128], strides = [1, 1]} : vector<16x256xf32> to vector<2x128xf32>
    %cst_27 = arith.constant dense<0.000000e+00> : vector<2x128xf32>
    %97 = tpu.matmul %86, %7, %cst_27 {dimension_numbers = #tpu.dot_dimension_numbers<[1], [0], [0], [1], [0, 0, 1, 1], [], []>} : vector<2x32xf32>, vector<32x128xf32>, vector<2x128xf32> -> vector<2x128xf32>
    %98 = arith.addf %96, %97 : vector<2x128xf32>
    %99 = arith.negf %95 : vector<2x128xf32>
    %100 = math.exp %99 : vector<2x128xf32>
    %cst_28 = arith.constant 1.000000e+00 : f32
    %101 = vector.broadcast %cst_28 : f32 to vector<2x128xf32>
    %102 = arith.addf %101, %100 : vector<2x128xf32>
    %103 = arith.divf %101, %102 : vector<2x128xf32>
    %104 = math.tanh %95 : vector<2x128xf32>
    %105 = vector.extract_strided_slice %103 {offsets = [0, 0], sizes = [2, 32], strides = [1, 1]} : vector<2x128xf32> to vector<2x32xf32>
    %106 = vector.extract_strided_slice %103 {offsets = [0, 32], sizes = [2, 32], strides = [1, 1]} : vector<2x128xf32> to vector<2x32xf32>
    %107 = vector.extract_strided_slice %104 {offsets = [0, 64], sizes = [2, 32], strides = [1, 1]} : vector<2x128xf32> to vector<2x32xf32>
    %108 = vector.extract_strided_slice %103 {offsets = [0, 96], sizes = [2, 32], strides = [1, 1]} : vector<2x128xf32> to vector<2x32xf32>
    %109 = arith.mulf %106, %69 : vector<2x32xf32>
    %110 = arith.mulf %105, %107 : vector<2x32xf32>
    %111 = arith.addf %109, %110 : vector<2x32xf32>
    %112 = math.tanh %111 : vector<2x32xf32>
    %113 = arith.mulf %108, %112 : vector<2x32xf32>
    %114 = arith.negf %98 : vector<2x128xf32>
    %115 = math.exp %114 : vector<2x128xf32>
    %cst_29 = arith.constant 1.000000e+00 : f32
    %116 = vector.broadcast %cst_29 : f32 to vector<2x128xf32>
    %117 = arith.addf %116, %115 : vector<2x128xf32>
    %118 = arith.divf %116, %117 : vector<2x128xf32>
    %119 = math.tanh %98 : vector<2x128xf32>
    %120 = vector.extract_strided_slice %118 {offsets = [0, 0], sizes = [2, 32], strides = [1, 1]} : vector<2x128xf32> to vector<2x32xf32>
    %121 = vector.extract_strided_slice %118 {offsets = [0, 32], sizes = [2, 32], strides = [1, 1]} : vector<2x128xf32> to vector<2x32xf32>
    %122 = vector.extract_strided_slice %119 {offsets = [0, 64], sizes = [2, 32], strides = [1, 1]} : vector<2x128xf32> to vector<2x32xf32>
    %123 = vector.extract_strided_slice %118 {offsets = [0, 96], sizes = [2, 32], strides = [1, 1]} : vector<2x128xf32> to vector<2x32xf32>
    %124 = arith.mulf %121, %84 : vector<2x32xf32>
    %125 = arith.mulf %120, %122 : vector<2x32xf32>
    %126 = arith.addf %124, %125 : vector<2x32xf32>
    %127 = math.tanh %126 : vector<2x32xf32>
    %128 = arith.mulf %123, %127 : vector<2x32xf32>
    %c0_30 = arith.constant 0 : index
    %c2 = arith.constant 2 : index
    %c0_31 = arith.constant 0 : index
    %129 = vector.load %arg5[%c0_30, %c2, %c0_31] : memref<2x8x64xf32, #tpu.memory_space<vmem>>, vector<2x1x32xf32>
    %130 = vector.shape_cast %129 : vector<2x1x32xf32> to vector<2x32xf32>
    %131 = vector.shape_cast %113 : vector<2x32xf32> to vector<2x1x32xf32>
    tpu.vector_store %arg5[%c0_30, %c2, %c0_31], %131 {strides = array<i32>} : memref<2x8x64xf32, #tpu.memory_space<vmem>>, vector<2x1x32xf32>,
    %c0_32 = arith.constant 0 : index
    %c5 = arith.constant 5 : index
    %c32_33 = arith.constant 32 : index
    %132 = vector.load %arg5[%c0_32, %c5, %c32_33] : memref<2x8x64xf32, #tpu.memory_space<vmem>>, vector<2x1x32xf32>
    %133 = vector.shape_cast %132 : vector<2x1x32xf32> to vector<2x32xf32>
    %134 = vector.shape_cast %128 : vector<2x32xf32> to vector<2x1x32xf32>
    tpu.vector_store %arg5[%c0_32, %c5, %c32_33], %134 {strides = array<i32>} : memref<2x8x64xf32, #tpu.memory_space<vmem>>, vector<2x1x32xf32>,
    %135 = vector.extract_strided_slice %5 {offsets = [6, 0], sizes = [2, 128], strides = [1, 1]} : vector<16x256xf32> to vector<2x128xf32>
    %cst_34 = arith.constant dense<0.000000e+00> : vector<2x128xf32>
    %136 = tpu.matmul %113, %6, %cst_34 {dimension_numbers = #tpu.dot_dimension_numbers<[1], [0], [0], [1], [0, 0, 1, 1], [], []>} : vector<2x32xf32>, vector<32x128xf32>, vector<2x128xf32> -> vector<2x128xf32>
    %137 = arith.addf %135, %136 : vector<2x128xf32>
    %138 = vector.extract_strided_slice %5 {offsets = [8, 128], sizes = [2, 128], strides = [1, 1]} : vector<16x256xf32> to vector<2x128xf32>
    %cst_35 = arith.constant dense<0.000000e+00> : vector<2x128xf32>
    %139 = tpu.matmul %128, %7, %cst_35 {dimension_numbers = #tpu.dot_dimension_numbers<[1], [0], [0], [1], [0, 0, 1, 1], [], []>} : vector<2x32xf32>, vector<32x128xf32>, vector<2x128xf32> -> vector<2x128xf32>
    %140 = arith.addf %138, %139 : vector<2x128xf32>
    %141 = arith.negf %137 : vector<2x128xf32>
    %142 = math.exp %141 : vector<2x128xf32>
    %cst_36 = arith.constant 1.000000e+00 : f32
    %143 = vector.broadcast %cst_36 : f32 to vector<2x128xf32>
    %144 = arith.addf %143, %142 : vector<2x128xf32>
    %145 = arith.divf %143, %144 : vector<2x128xf32>
    %146 = math.tanh %137 : vector<2x128xf32>
    %147 = vector.extract_strided_slice %145 {offsets = [0, 0], sizes = [2, 32], strides = [1, 1]} : vector<2x128xf32> to vector<2x32xf32>
    %148 = vector.extract_strided_slice %145 {offsets = [0, 32], sizes = [2, 32], strides = [1, 1]} : vector<2x128xf32> to vector<2x32xf32>
    %149 = vector.extract_strided_slice %146 {offsets = [0, 64], sizes = [2, 32], strides = [1, 1]} : vector<2x128xf32> to vector<2x32xf32>
    %150 = vector.extract_strided_slice %145 {offsets = [0, 96], sizes = [2, 32], strides = [1, 1]} : vector<2x128xf32> to vector<2x32xf32>
    %151 = arith.mulf %148, %111 : vector<2x32xf32>
    %152 = arith.mulf %147, %149 : vector<2x32xf32>
    %153 = arith.addf %151, %152 : vector<2x32xf32>
    %154 = math.tanh %153 : vector<2x32xf32>
    %155 = arith.mulf %150, %154 : vector<2x32xf32>
    %156 = arith.negf %140 : vector<2x128xf32>
    %157 = math.exp %156 : vector<2x128xf32>
    %cst_37 = arith.constant 1.000000e+00 : f32
    %158 = vector.broadcast %cst_37 : f32 to vector<2x128xf32>
    %159 = arith.addf %158, %157 : vector<2x128xf32>
    %160 = arith.divf %158, %159 : vector<2x128xf32>
    %161 = math.tanh %140 : vector<2x128xf32>
    %162 = vector.extract_strided_slice %160 {offsets = [0, 0], sizes = [2, 32], strides = [1, 1]} : vector<2x128xf32> to vector<2x32xf32>
    %163 = vector.extract_strided_slice %160 {offsets = [0, 32], sizes = [2, 32], strides = [1, 1]} : vector<2x128xf32> to vector<2x32xf32>
    %164 = vector.extract_strided_slice %161 {offsets = [0, 64], sizes = [2, 32], strides = [1, 1]} : vector<2x128xf32> to vector<2x32xf32>
    %165 = vector.extract_strided_slice %160 {offsets = [0, 96], sizes = [2, 32], strides = [1, 1]} : vector<2x128xf32> to vector<2x32xf32>
    %166 = arith.mulf %163, %126 : vector<2x32xf32>
    %167 = arith.mulf %162, %164 : vector<2x32xf32>
    %168 = arith.addf %166, %167 : vector<2x32xf32>
    %169 = math.tanh %168 : vector<2x32xf32>
    %170 = arith.mulf %165, %169 : vector<2x32xf32>
    %c0_38 = arith.constant 0 : index
    %c3 = arith.constant 3 : index
    %c0_39 = arith.constant 0 : index
    %171 = vector.load %arg5[%c0_38, %c3, %c0_39] : memref<2x8x64xf32, #tpu.memory_space<vmem>>, vector<2x1x32xf32>
    %172 = vector.shape_cast %171 : vector<2x1x32xf32> to vector<2x32xf32>
    %173 = vector.shape_cast %155 : vector<2x32xf32> to vector<2x1x32xf32>
    tpu.vector_store %arg5[%c0_38, %c3, %c0_39], %173 {strides = array<i32>} : memref<2x8x64xf32, #tpu.memory_space<vmem>>, vector<2x1x32xf32>,
    %c0_40 = arith.constant 0 : index
    %c4 = arith.constant 4 : index
    %c32_41 = arith.constant 32 : index
    %174 = vector.load %arg5[%c0_40, %c4, %c32_41] : memref<2x8x64xf32, #tpu.memory_space<vmem>>, vector<2x1x32xf32>
    %175 = vector.shape_cast %174 : vector<2x1x32xf32> to vector<2x32xf32>
    %176 = vector.shape_cast %170 : vector<2x32xf32> to vector<2x1x32xf32>
    tpu.vector_store %arg5[%c0_40, %c4, %c32_41], %176 {strides = array<i32>} : memref<2x8x64xf32, #tpu.memory_space<vmem>>, vector<2x1x32xf32>,
    %177 = vector.extract_strided_slice %5 {offsets = [8, 0], sizes = [2, 128], strides = [1, 1]} : vector<16x256xf32> to vector<2x128xf32>
    %cst_42 = arith.constant dense<0.000000e+00> : vector<2x128xf32>
    %178 = tpu.matmul %155, %6, %cst_42 {dimension_numbers = #tpu.dot_dimension_numbers<[1], [0], [0], [1], [0, 0, 1, 1], [], []>} : vector<2x32xf32>, vector<32x128xf32>, vector<2x128xf32> -> vector<2x128xf32>
    %179 = arith.addf %177, %178 : vector<2x128xf32>
    %180 = vector.extract_strided_slice %5 {offsets = [6, 128], sizes = [2, 128], strides = [1, 1]} : vector<16x256xf32> to vector<2x128xf32>
    %cst_43 = arith.constant dense<0.000000e+00> : vector<2x128xf32>
    %181 = tpu.matmul %170, %7, %cst_43 {dimension_numbers = #tpu.dot_dimension_numbers<[1], [0], [0], [1], [0, 0, 1, 1], [], []>} : vector<2x32xf32>, vector<32x128xf32>, vector<2x128xf32> -> vector<2x128xf32>
    %182 = arith.addf %180, %181 : vector<2x128xf32>
    %183 = arith.negf %179 : vector<2x128xf32>
    %184 = math.exp %183 : vector<2x128xf32>
    %cst_44 = arith.constant 1.000000e+00 : f32
    %185 = vector.broadcast %cst_44 : f32 to vector<2x128xf32>
    %186 = arith.addf %185, %184 : vector<2x128xf32>
    %187 = arith.divf %185, %186 : vector<2x128xf32>
    %188 = math.tanh %179 : vector<2x128xf32>
    %189 = vector.extract_strided_slice %187 {offsets = [0, 0], sizes = [2, 32], strides = [1, 1]} : vector<2x128xf32> to vector<2x32xf32>
    %190 = vector.extract_strided_slice %187 {offsets = [0, 32], sizes = [2, 32], strides = [1, 1]} : vector<2x128xf32> to vector<2x32xf32>
    %191 = vector.extract_strided_slice %188 {offsets = [0, 64], sizes = [2, 32], strides = [1, 1]} : vector<2x128xf32> to vector<2x32xf32>
    %192 = vector.extract_strided_slice %187 {offsets = [0, 96], sizes = [2, 32], strides = [1, 1]} : vector<2x128xf32> to vector<2x32xf32>
    %193 = arith.mulf %190, %153 : vector<2x32xf32>
    %194 = arith.mulf %189, %191 : vector<2x32xf32>
    %195 = arith.addf %193, %194 : vector<2x32xf32>
    %196 = math.tanh %195 : vector<2x32xf32>
    %197 = arith.mulf %192, %196 : vector<2x32xf32>
    %198 = arith.negf %182 : vector<2x128xf32>
    %199 = math.exp %198 : vector<2x128xf32>
    %cst_45 = arith.constant 1.000000e+00 : f32
    %200 = vector.broadcast %cst_45 : f32 to vector<2x128xf32>
    %201 = arith.addf %200, %199 : vector<2x128xf32>
    %202 = arith.divf %200, %201 : vector<2x128xf32>
    %203 = math.tanh %182 : vector<2x128xf32>
    %204 = vector.extract_strided_slice %202 {offsets = [0, 0], sizes = [2, 32], strides = [1, 1]} : vector<2x128xf32> to vector<2x32xf32>
    %205 = vector.extract_strided_slice %202 {offsets = [0, 32], sizes = [2, 32], strides = [1, 1]} : vector<2x128xf32> to vector<2x32xf32>
    %206 = vector.extract_strided_slice %203 {offsets = [0, 64], sizes = [2, 32], strides = [1, 1]} : vector<2x128xf32> to vector<2x32xf32>
    %207 = vector.extract_strided_slice %202 {offsets = [0, 96], sizes = [2, 32], strides = [1, 1]} : vector<2x128xf32> to vector<2x32xf32>
    %208 = arith.mulf %205, %168 : vector<2x32xf32>
    %209 = arith.mulf %204, %206 : vector<2x32xf32>
    %210 = arith.addf %208, %209 : vector<2x32xf32>
    %211 = math.tanh %210 : vector<2x32xf32>
    %212 = arith.mulf %207, %211 : vector<2x32xf32>
    %c0_46 = arith.constant 0 : index
    %c4_47 = arith.constant 4 : index
    %c0_48 = arith.constant 0 : index
    %213 = vector.load %arg5[%c0_46, %c4_47, %c0_48] : memref<2x8x64xf32, #tpu.memory_space<vmem>>, vector<2x1x32xf32>
    %214 = vector.shape_cast %213 : vector<2x1x32xf32> to vector<2x32xf32>
    %215 = vector.shape_cast %197 : vector<2x32xf32> to vector<2x1x32xf32>
    tpu.vector_store %arg5[%c0_46, %c4_47, %c0_48], %215 {strides = array<i32>} : memref<2x8x64xf32, #tpu.memory_space<vmem>>, vector<2x1x32xf32>,
    %c0_49 = arith.constant 0 : index
    %c3_50 = arith.constant 3 : index
    %c32_51 = arith.constant 32 : index
    %216 = vector.load %arg5[%c0_49, %c3_50, %c32_51] : memref<2x8x64xf32, #tpu.memory_space<vmem>>, vector<2x1x32xf32>
    %217 = vector.shape_cast %216 : vector<2x1x32xf32> to vector<2x32xf32>
    %218 = vector.shape_cast %212 : vector<2x32xf32> to vector<2x1x32xf32>
    tpu.vector_store %arg5[%c0_49, %c3_50, %c32_51], %218 {strides = array<i32>} : memref<2x8x64xf32, #tpu.memory_space<vmem>>, vector<2x1x32xf32>,
    %219 = vector.extract_strided_slice %5 {offsets = [10, 0], sizes = [2, 128], strides = [1, 1]} : vector<16x256xf32> to vector<2x128xf32>
    %cst_52 = arith.constant dense<0.000000e+00> : vector<2x128xf32>
    %220 = tpu.matmul %197, %6, %cst_52 {dimension_numbers = #tpu.dot_dimension_numbers<[1], [0], [0], [1], [0, 0, 1, 1], [], []>} : vector<2x32xf32>, vector<32x128xf32>, vector<2x128xf32> -> vector<2x128xf32>
    %221 = arith.addf %219, %220 : vector<2x128xf32>
    %222 = vector.extract_strided_slice %5 {offsets = [4, 128], sizes = [2, 128], strides = [1, 1]} : vector<16x256xf32> to vector<2x128xf32>
    %cst_53 = arith.constant dense<0.000000e+00> : vector<2x128xf32>
    %223 = tpu.matmul %212, %7, %cst_53 {dimension_numbers = #tpu.dot_dimension_numbers<[1], [0], [0], [1], [0, 0, 1, 1], [], []>} : vector<2x32xf32>, vector<32x128xf32>, vector<2x128xf32> -> vector<2x128xf32>
    %224 = arith.addf %222, %223 : vector<2x128xf32>
    %225 = arith.negf %221 : vector<2x128xf32>
    %226 = math.exp %225 : vector<2x128xf32>
    %cst_54 = arith.constant 1.000000e+00 : f32
    %227 = vector.broadcast %cst_54 : f32 to vector<2x128xf32>
    %228 = arith.addf %227, %226 : vector<2x128xf32>
    %229 = arith.divf %227, %228 : vector<2x128xf32>
    %230 = math.tanh %221 : vector<2x128xf32>
    %231 = vector.extract_strided_slice %229 {offsets = [0, 0], sizes = [2, 32], strides = [1, 1]} : vector<2x128xf32> to vector<2x32xf32>
    %232 = vector.extract_strided_slice %229 {offsets = [0, 32], sizes = [2, 32], strides = [1, 1]} : vector<2x128xf32> to vector<2x32xf32>
    %233 = vector.extract_strided_slice %230 {offsets = [0, 64], sizes = [2, 32], strides = [1, 1]} : vector<2x128xf32> to vector<2x32xf32>
    %234 = vector.extract_strided_slice %229 {offsets = [0, 96], sizes = [2, 32], strides = [1, 1]} : vector<2x128xf32> to vector<2x32xf32>
    %235 = arith.mulf %232, %195 : vector<2x32xf32>
    %236 = arith.mulf %231, %233 : vector<2x32xf32>
    %237 = arith.addf %235, %236 : vector<2x32xf32>
    %238 = math.tanh %237 : vector<2x32xf32>
    %239 = arith.mulf %234, %238 : vector<2x32xf32>
    %240 = arith.negf %224 : vector<2x128xf32>
    %241 = math.exp %240 : vector<2x128xf32>
    %cst_55 = arith.constant 1.000000e+00 : f32
    %242 = vector.broadcast %cst_55 : f32 to vector<2x128xf32>
    %243 = arith.addf %242, %241 : vector<2x128xf32>
    %244 = arith.divf %242, %243 : vector<2x128xf32>
    %245 = math.tanh %224 : vector<2x128xf32>
    %246 = vector.extract_strided_slice %244 {offsets = [0, 0], sizes = [2, 32], strides = [1, 1]} : vector<2x128xf32> to vector<2x32xf32>
    %247 = vector.extract_strided_slice %244 {offsets = [0, 32], sizes = [2, 32], strides = [1, 1]} : vector<2x128xf32> to vector<2x32xf32>
    %248 = vector.extract_strided_slice %245 {offsets = [0, 64], sizes = [2, 32], strides = [1, 1]} : vector<2x128xf32> to vector<2x32xf32>
    %249 = vector.extract_strided_slice %244 {offsets = [0, 96], sizes = [2, 32], strides = [1, 1]} : vector<2x128xf32> to vector<2x32xf32>
    %250 = arith.mulf %247, %210 : vector<2x32xf32>
    %251 = arith.mulf %246, %248 : vector<2x32xf32>
    %252 = arith.addf %250, %251 : vector<2x32xf32>
    %253 = math.tanh %252 : vector<2x32xf32>
    %254 = arith.mulf %249, %253 : vector<2x32xf32>
    %c0_56 = arith.constant 0 : index
    %c5_57 = arith.constant 5 : index
    %c0_58 = arith.constant 0 : index
    %255 = vector.load %arg5[%c0_56, %c5_57, %c0_58] : memref<2x8x64xf32, #tpu.memory_space<vmem>>, vector<2x1x32xf32>
    %256 = vector.shape_cast %255 : vector<2x1x32xf32> to vector<2x32xf32>
    %257 = vector.shape_cast %239 : vector<2x32xf32> to vector<2x1x32xf32>
    tpu.vector_store %arg5[%c0_56, %c5_57, %c0_58], %257 {strides = array<i32>} : memref<2x8x64xf32, #tpu.memory_space<vmem>>, vector<2x1x32xf32>,
    %c0_59 = arith.constant 0 : index
    %c2_60 = arith.constant 2 : index
    %c32_61 = arith.constant 32 : index
    %258 = vector.load %arg5[%c0_59, %c2_60, %c32_61] : memref<2x8x64xf32, #tpu.memory_space<vmem>>, vector<2x1x32xf32>
    %259 = vector.shape_cast %258 : vector<2x1x32xf32> to vector<2x32xf32>
    %260 = vector.shape_cast %254 : vector<2x32xf32> to vector<2x1x32xf32>
    tpu.vector_store %arg5[%c0_59, %c2_60, %c32_61], %260 {strides = array<i32>} : memref<2x8x64xf32, #tpu.memory_space<vmem>>, vector<2x1x32xf32>,
    %261 = vector.extract_strided_slice %5 {offsets = [12, 0], sizes = [2, 128], strides = [1, 1]} : vector<16x256xf32> to vector<2x128xf32>
    %cst_62 = arith.constant dense<0.000000e+00> : vector<2x128xf32>
    %262 = tpu.matmul %239, %6, %cst_62 {dimension_numbers = #tpu.dot_dimension_numbers<[1], [0], [0], [1], [0, 0, 1, 1], [], []>} : vector<2x32xf32>, vector<32x128xf32>, vector<2x128xf32> -> vector<2x128xf32>
    %263 = arith.addf %261, %262 : vector<2x128xf32>
    %264 = vector.extract_strided_slice %5 {offsets = [2, 128], sizes = [2, 128], strides = [1, 1]} : vector<16x256xf32> to vector<2x128xf32>
    %cst_63 = arith.constant dense<0.000000e+00> : vector<2x128xf32>
    %265 = tpu.matmul %254, %7, %cst_63 {dimension_numbers = #tpu.dot_dimension_numbers<[1], [0], [0], [1], [0, 0, 1, 1], [], []>} : vector<2x32xf32>, vector<32x128xf32>, vector<2x128xf32> -> vector<2x128xf32>
    %266 = arith.addf %264, %265 : vector<2x128xf32>
    %267 = arith.negf %263 : vector<2x128xf32>
    %268 = math.exp %267 : vector<2x128xf32>
    %cst_64 = arith.constant 1.000000e+00 : f32
    %269 = vector.broadcast %cst_64 : f32 to vector<2x128xf32>
    %270 = arith.addf %269, %268 : vector<2x128xf32>
    %271 = arith.divf %269, %270 : vector<2x128xf32>
    %272 = math.tanh %263 : vector<2x128xf32>
    %273 = vector.extract_strided_slice %271 {offsets = [0, 0], sizes = [2, 32], strides = [1, 1]} : vector<2x128xf32> to vector<2x32xf32>
    %274 = vector.extract_strided_slice %271 {offsets = [0, 32], sizes = [2, 32], strides = [1, 1]} : vector<2x128xf32> to vector<2x32xf32>
    %275 = vector.extract_strided_slice %272 {offsets = [0, 64], sizes = [2, 32], strides = [1, 1]} : vector<2x128xf32> to vector<2x32xf32>
    %276 = vector.extract_strided_slice %271 {offsets = [0, 96], sizes = [2, 32], strides = [1, 1]} : vector<2x128xf32> to vector<2x32xf32>
    %277 = arith.mulf %274, %237 : vector<2x32xf32>
    %278 = arith.mulf %273, %275 : vector<2x32xf32>
    %279 = arith.addf %277, %278 : vector<2x32xf32>
    %280 = math.tanh %279 : vector<2x32xf32>
    %281 = arith.mulf %276, %280 : vector<2x32xf32>
    %282 = arith.negf %266 : vector<2x128xf32>
    %283 = math.exp %282 : vector<2x128xf32>
    %cst_65 = arith.constant 1.000000e+00 : f32
    %284 = vector.broadcast %cst_65 : f32 to vector<2x128xf32>
    %285 = arith.addf %284, %283 : vector<2x128xf32>
    %286 = arith.divf %284, %285 : vector<2x128xf32>
    %287 = math.tanh %266 : vector<2x128xf32>
    %288 = vector.extract_strided_slice %286 {offsets = [0, 0], sizes = [2, 32], strides = [1, 1]} : vector<2x128xf32> to vector<2x32xf32>
    %289 = vector.extract_strided_slice %286 {offsets = [0, 32], sizes = [2, 32], strides = [1, 1]} : vector<2x128xf32> to vector<2x32xf32>
    %290 = vector.extract_strided_slice %287 {offsets = [0, 64], sizes = [2, 32], strides = [1, 1]} : vector<2x128xf32> to vector<2x32xf32>
    %291 = vector.extract_strided_slice %286 {offsets = [0, 96], sizes = [2, 32], strides = [1, 1]} : vector<2x128xf32> to vector<2x32xf32>
    %292 = arith.mulf %289, %252 : vector<2x32xf32>
    %293 = arith.mulf %288, %290 : vector<2x32xf32>
    %294 = arith.addf %292, %293 : vector<2x32xf32>
    %295 = math.tanh %294 : vector<2x32xf32>
    %296 = arith.mulf %291, %295 : vector<2x32xf32>
    %c0_66 = arith.constant 0 : index
    %c6_67 = arith.constant 6 : index
    %c0_68 = arith.constant 0 : index
    %297 = vector.load %arg5[%c0_66, %c6_67, %c0_68] : memref<2x8x64xf32, #tpu.memory_space<vmem>>, vector<2x1x32xf32>
    %298 = vector.shape_cast %297 : vector<2x1x32xf32> to vector<2x32xf32>
    %299 = vector.shape_cast %281 : vector<2x32xf32> to vector<2x1x32xf32>
    tpu.vector_store %arg5[%c0_66, %c6_67, %c0_68], %299 {strides = array<i32>} : memref<2x8x64xf32, #tpu.memory_space<vmem>>, vector<2x1x32xf32>,
    %c0_69 = arith.constant 0 : index
    %c1_70 = arith.constant 1 : index
    %c32_71 = arith.constant 32 : index
    %300 = vector.load %arg5[%c0_69, %c1_70, %c32_71] : memref<2x8x64xf32, #tpu.memory_space<vmem>>, vector<2x1x32xf32>
    %301 = vector.shape_cast %300 : vector<2x1x32xf32> to vector<2x32xf32>
    %302 = vector.shape_cast %296 : vector<2x32xf32> to vector<2x1x32xf32>
    tpu.vector_store %arg5[%c0_69, %c1_70, %c32_71], %302 {strides = array<i32>} : memref<2x8x64xf32, #tpu.memory_space<vmem>>, vector<2x1x32xf32>,
    %303 = vector.extract_strided_slice %5 {offsets = [14, 0], sizes = [2, 128], strides = [1, 1]} : vector<16x256xf32> to vector<2x128xf32>
    %cst_72 = arith.constant dense<0.000000e+00> : vector<2x128xf32>
    %304 = tpu.matmul %281, %6, %cst_72 {dimension_numbers = #tpu.dot_dimension_numbers<[1], [0], [0], [1], [0, 0, 1, 1], [], []>} : vector<2x32xf32>, vector<32x128xf32>, vector<2x128xf32> -> vector<2x128xf32>
    %305 = arith.addf %303, %304 : vector<2x128xf32>
    %306 = vector.extract_strided_slice %5 {offsets = [0, 128], sizes = [2, 128], strides = [1, 1]} : vector<16x256xf32> to vector<2x128xf32>
    %cst_73 = arith.constant dense<0.000000e+00> : vector<2x128xf32>
    %307 = tpu.matmul %296, %7, %cst_73 {dimension_numbers = #tpu.dot_dimension_numbers<[1], [0], [0], [1], [0, 0, 1, 1], [], []>} : vector<2x32xf32>, vector<32x128xf32>, vector<2x128xf32> -> vector<2x128xf32>
    %308 = arith.addf %306, %307 : vector<2x128xf32>
    %309 = arith.negf %305 : vector<2x128xf32>
    %310 = math.exp %309 : vector<2x128xf32>
    %cst_74 = arith.constant 1.000000e+00 : f32
    %311 = vector.broadcast %cst_74 : f32 to vector<2x128xf32>
    %312 = arith.addf %311, %310 : vector<2x128xf32>
    %313 = arith.divf %311, %312 : vector<2x128xf32>
    %314 = math.tanh %305 : vector<2x128xf32>
    %315 = vector.extract_strided_slice %313 {offsets = [0, 0], sizes = [2, 32], strides = [1, 1]} : vector<2x128xf32> to vector<2x32xf32>
    %316 = vector.extract_strided_slice %313 {offsets = [0, 32], sizes = [2, 32], strides = [1, 1]} : vector<2x128xf32> to vector<2x32xf32>
    %317 = vector.extract_strided_slice %314 {offsets = [0, 64], sizes = [2, 32], strides = [1, 1]} : vector<2x128xf32> to vector<2x32xf32>
    %318 = vector.extract_strided_slice %313 {offsets = [0, 96], sizes = [2, 32], strides = [1, 1]} : vector<2x128xf32> to vector<2x32xf32>
    %319 = arith.mulf %316, %279 : vector<2x32xf32>
    %320 = arith.mulf %315, %317 : vector<2x32xf32>
    %321 = arith.addf %319, %320 : vector<2x32xf32>
    %322 = math.tanh %321 : vector<2x32xf32>
    %323 = arith.mulf %318, %322 : vector<2x32xf32>
    %324 = arith.negf %308 : vector<2x128xf32>
    %325 = math.exp %324 : vector<2x128xf32>
    %cst_75 = arith.constant 1.000000e+00 : f32
    %326 = vector.broadcast %cst_75 : f32 to vector<2x128xf32>
    %327 = arith.addf %326, %325 : vector<2x128xf32>
    %328 = arith.divf %326, %327 : vector<2x128xf32>
    %329 = math.tanh %308 : vector<2x128xf32>
    %330 = vector.extract_strided_slice %328 {offsets = [0, 0], sizes = [2, 32], strides = [1, 1]} : vector<2x128xf32> to vector<2x32xf32>
    %331 = vector.extract_strided_slice %328 {offsets = [0, 32], sizes = [2, 32], strides = [1, 1]} : vector<2x128xf32> to vector<2x32xf32>
    %332 = vector.extract_strided_slice %329 {offsets = [0, 64], sizes = [2, 32], strides = [1, 1]} : vector<2x128xf32> to vector<2x32xf32>
    %333 = vector.extract_strided_slice %328 {offsets = [0, 96], sizes = [2, 32], strides = [1, 1]} : vector<2x128xf32> to vector<2x32xf32>
    %334 = arith.mulf %331, %294 : vector<2x32xf32>
    %335 = arith.mulf %330, %332 : vector<2x32xf32>
    %336 = arith.addf %334, %335 : vector<2x32xf32>
    %337 = math.tanh %336 : vector<2x32xf32>
    %338 = arith.mulf %333, %337 : vector<2x32xf32>
    %c0_76 = arith.constant 0 : index
    %c7_77 = arith.constant 7 : index
    %c0_78 = arith.constant 0 : index
    %339 = vector.load %arg5[%c0_76, %c7_77, %c0_78] : memref<2x8x64xf32, #tpu.memory_space<vmem>>, vector<2x1x32xf32>
    %340 = vector.shape_cast %339 : vector<2x1x32xf32> to vector<2x32xf32>
    %341 = vector.shape_cast %323 : vector<2x32xf32> to vector<2x1x32xf32>
    tpu.vector_store %arg5[%c0_76, %c7_77, %c0_78], %341 {strides = array<i32>} : memref<2x8x64xf32, #tpu.memory_space<vmem>>, vector<2x1x32xf32>,
    %c0_79 = arith.constant 0 : index
    %c0_80 = arith.constant 0 : index
    %c32_81 = arith.constant 32 : index
    %342 = vector.load %arg5[%c0_79, %c0_80, %c32_81] : memref<2x8x64xf32, #tpu.memory_space<vmem>>, vector<2x1x32xf32>
    %343 = vector.shape_cast %342 : vector<2x1x32xf32> to vector<2x32xf32>
    %344 = vector.shape_cast %338 : vector<2x32xf32> to vector<2x1x32xf32>
    tpu.vector_store %arg5[%c0_79, %c0_80, %c32_81], %344 {strides = array<i32>} : memref<2x8x64xf32, #tpu.memory_space<vmem>>, vector<2x1x32xf32>,
    %c0_82 = arith.constant 0 : index
    %c0_83 = arith.constant 0 : index
    %c0_84 = arith.constant 0 : index
    %345 = vector.load %arg6[%c0_82, %c0_83, %c0_84] : memref<2x2x32xf32, #tpu.memory_space<vmem>>, vector<1x2x32xf32>
    %346 = vector.shape_cast %345 : vector<1x2x32xf32> to vector<2x32xf32>
    %347 = vector.shape_cast %323 : vector<2x32xf32> to vector<1x2x32xf32>
    tpu.vector_store %arg6[%c0_82, %c0_83, %c0_84], %347 {strides = array<i32>} : memref<2x2x32xf32, #tpu.memory_space<vmem>>, vector<1x2x32xf32>,
    %c1_85 = arith.constant 1 : index
    %c0_86 = arith.constant 0 : index
    %c0_87 = arith.constant 0 : index
    %348 = vector.load %arg6[%c1_85, %c0_86, %c0_87] : memref<2x2x32xf32, #tpu.memory_space<vmem>>, vector<1x2x32xf32>
    %349 = vector.shape_cast %348 : vector<1x2x32xf32> to vector<2x32xf32>
    %350 = vector.shape_cast %338 : vector<2x32xf32> to vector<1x2x32xf32>
    tpu.vector_store %arg6[%c1_85, %c0_86, %c0_87], %350 {strides = array<i32>} : memref<2x2x32xf32, #tpu.memory_space<vmem>>, vector<1x2x32xf32>,
    return
  }
}

</mosaic_0001>

<llo_original>
// kernel: encoder_rnn_forward.1
$region0: #{encoder_rnn_forward.1}
  #allocation0 [shape = 'u32[]', space=smem, size = 0x4, offset = 0x4, fixed_abs, tag = 'smem constant byte address 0x4 - core index']
  #allocation1 [shape = 'u32[144,128]{1,0:T(1,128)}', space=vmem, size = 0x12000, scoped, tag = 'internal scratch']
  %s0 = inlined_call_operand.vmem [shape: f32[16,32], index: 0, kind: input, shape index: {}]
  %s1 = inlined_call_operand.vmem [shape: f32[32,256], index: 1, kind: input, shape index: {}]
  %s2 = inlined_call_operand.vmem [shape: f32[1,256], index: 2, kind: input, shape index: {}]
  %s3 = inlined_call_operand.vmem [shape: f32[32,128], index: 3, kind: input, shape index: {}]
  %s4 = inlined_call_operand.vmem [shape: f32[32,128], index: 4, kind: input, shape index: {}]
  %s5 = inlined_call_operand.hbm [shape: f32[2,8,64], index: 5, kind: output, shape index: {0}]
  %s6 = inlined_call_operand.hbm [shape: f32[2,2,32], index: 6, kind: output, shape index: {1}]
  %7 = xla_tuple %s5, %s6
  %s8 = sld [smem:[#allocation0]]
  $region38: #{encoder_rnn_forward.1} parent=0
    _
  %s10 = ssub.s32 1, %s8
  %s11 = scalar_select 0, %s10, %s8
  $region1: #{encoder_rnn_forward.1} parent=0
    #allocation2 [shape = 'u8[8192]{0}', space=vmem, size = 0x2000, scoped, tag = 'output window, operand 0, single buffered']
    #allocation3 [shape = 's32[1]{0}', space=sflag, size = 0x4, scoped, tag = 'scoped memory for encoder_rnn_forward.1']
    #allocation4 [shape = 'u8[2048]{0}', space=vmem, size = 0x800, scoped, tag = 'output window, operand 1, single buffered']
    #allocation5 [shape = 's32[1]{0}', space=sflag, size = 0x4, scoped, tag = 'scoped memory for encoder_rnn_forward.1']
    %12 = vsyncpa [#allocation3], 0
    %13 = vsyncpa [#allocation5], 0
    // Predicated region
    $region2: #{encoder_rnn_forward.1} parent=1 // pred_check
      _
    $region3: #{encoder_rnn_forward.1} parent=1 // pred_check_branch
      %15 = sbr.rel (0) target = $region5
    $region4: #{encoder_rnn_forward.1} parent=1 // pred_region
      _
    $region5: #{encoder_rnn_forward.1} parent=1 // pred_fallthru
      _
    // Predicated region
    $region6: #{encoder_rnn_forward.1} parent=1 // pred_check
      _
    $region7: #{encoder_rnn_forward.1} parent=1 // pred_check_branch
      %17 = sbr.rel (0) target = $region9
    $region8: #{encoder_rnn_forward.1} parent=1 // pred_region
      _
    $region9: #{encoder_rnn_forward.1} parent=1 // pred_fallthru
      _
    // Predicated region
    $region10: #{encoder_rnn_forward.1} parent=1 // pred_check
      _
    $region11: #{encoder_rnn_forward.1} parent=1 // pred_check_branch
      %19 = sbr.rel (0) target = $region13
    $region12: #{encoder_rnn_forward.1} parent=1 // pred_region
      _
    $region13: #{encoder_rnn_forward.1} parent=1 // pred_fallthru
      _
    // Predicated region
    $region14: #{encoder_rnn_forward.1} parent=1 // pred_check
      _
    $region15: #{encoder_rnn_forward.1} parent=1 // pred_check_branch
      %21 = sbr.rel (0) target = $region17
    $region16: #{encoder_rnn_forward.1} parent=1 // pred_region
      _
    $region17: #{encoder_rnn_forward.1} parent=1 // pred_fallthru
      _
    // Predicated region
    $region18: #{encoder_rnn_forward.1} parent=1 // pred_check
      _
    $region19: #{encoder_rnn_forward.1} parent=1 // pred_check_branch
      %23 = sbr.rel (0) target = $region21
    $region20: #{encoder_rnn_forward.1} parent=1 // pred_region
      _
    $region21: #{encoder_rnn_forward.1} parent=1 // pred_fallthru
      _
    %v24 = vld [vmem:[%s0] sm:$0xff]
    %v25 = vld [vmem:[%s0 + $0x8] sm:$0xff]
    %v26 = vld [vmem:[%s1] sm:$0xff]
    %v27 = vld [vmem:[%s1 + $0x8] sm:$0xff]
    %v28 = vld [vmem:[%s1 + $0x10] sm:$0xff]
    %v29 = vld [vmem:[%s1 + $0x18] sm:$0xff]
    %v30 = vld [vmem:[%s1 + $0x20] sm:$0xff]
    %v31 = vld [vmem:[%s1 + $0x28] sm:$0xff]
    %v32 = vld [vmem:[%s1 + $0x30] sm:$0xff]
    %v33 = vld [vmem:[%s1 + $0x38] sm:$0xff]
    %v34 = vld [vmem:[%s2] sm:$0x3]
    %v36 = vlaneseq
    %v37 = vshrl.u32 %v36, 7
    %v38 = vsub.s32 0, %v37
    %v39 = vrot.slane %v34, %v38
    %v40 = vlaneseq
    %v41 = vshrl.u32 %v40, 7
    %v42 = vsub.s32 1, %v41
    %v43 = vrot.slane %v34, %v42
    %vm46 = vcmask 261120
    %v48 = vsel %vm46, %v24, 0
    %v51 = vsel %vm46, %v25, 0
    %53 = vmatprep.subr.mxu0 %v27
    %54 = vmatpush1.msra.mxu0 %v26
    %55 = vmatprep.subr.mxu0 %v29
    %56 = vmatpush1.msra.mxu0 %v28
    %57 = vmatprep.subr.mxu0 %v31
    %58 = vmatpush1.msra.mxu0 %v30
    %59 = vmatprep.subr.mxu0 %v33
    %60 = vmatpush1.msra.mxu0 %v32
    %61 = vmatprep.subr.mxu0 0.0
    %62 = vmatpush1.msra.mxu0 0.0
    %63 = vmatprep.subr.mxu0 0.0
    %64 = vmatpush1.msra.mxu0 0.0
    %65 = vmatprep.subr.mxu0 0.0
    %66 = vmatpush1.msra.mxu0 0.0
    %67 = vmatprep.subr.mxu0 0.0
    %68 = vmatpush1.msra.mxu0 0.0
    %69 = vmatprep.subr.mxu0 0.0
    %70 = vmatpush1.msra.mxu0 0.0
    %71 = vmatprep.subr.mxu0 0.0
    %72 = vmatpush1.msra.mxu0 0.0
    %73 = vmatprep.subr.mxu0 0.0
    %74 = vmatpush1.msra.mxu0 0.0
    %75 = vmatprep.subr.mxu0 0.0
    %76 = vmatpush1.msra.mxu0 0.0
    %77 = vmatprep.subr.mxu0 0.0
    %78 = vmatpush1.msra.mxu0 0.0
    %79 = vmatprep.subr.mxu0 0.0
    %80 = vmatpush1.msra.mxu0 0.0
    %81 = vmatprep.subr.mxu0 0.0
    %82 = vmatpush1.msra.mxu0 0.0
    %83 = vmatprep.subr.mxu0 0.0
    %84 = vmatpush1.msra.mxu0 0.0
    %85 = vmatprep.subr.mxu0 0.0
    %86 = vmatpush1.msra.mxu0 0.0
    %87 = vmatprep.subr.mxu0 0.0
    %88 = vmatpush1.msra.mxu0 0.0
    %89 = vmatprep.subr.mxu0 0.0
    %90 = vmatpush1.msra.mxu0 0.0
    %91 = vmatprep.subr.mxu0 0.0
    %92 = vmatpush1.msra.mxu0 0.0
    %93 = vmatprep.subr.mxu0 0.0
    %94 = vmatpush1.msra.mxu0 0.0
    %95 = vmatprep.subr.mxu0 0.0
    %96 = vmatpush1.msra.mxu0 0.0
    %97 = vmatprep.subr.mxu0 0.0
    %98 = vmatpush1.msra.mxu0 0.0
    %99 = vmatprep.subr.mxu0 0.0
    %100 = vmatpush1.msra.mxu0 0.0
    %101 = vmatprep.subr.mxu0 0.0
    %102 = vmatpush1.msra.mxu0 0.0
    %103 = vmatprep.subr.mxu0 0.0
    %104 = vmatpush1.msra.mxu0 0.0
    %105 = vmatprep.subr.mxu0 0.0
    %106 = vmatpush1.msra.mxu0 0.0
    %107 = vmatprep.subr.mxu0 0.0
    %108 = vmatpush1.msra.mxu0 0.0
    %109 = vmatprep.subr.mxu0 0.0
    %110 = vmatpush1.msra.mxu0 0.0
    %111 = vmatprep.subr.mxu0 0.0
    %112 = vmatpush1.msra.mxu0 0.0
    %113 = vmatprep.subr.mxu0 0.0
    %114 = vmatpush1.msra.mxu0 0.0
    %115 = vmatprep.subr.mxu0 0.0
    %116 = vmatpush1.msra.mxu0 0.0
    %117 = vmatprep.mubr.f32.mxu0 0.0
    %118 = vmatmul.mubr.f32.gmra.mrb[0].mxu0 %v48
    %v119 = vpop.f32.mrb[0].mxu0
    %v120 = vadd.f32 %v39, %v119
    %v121 = vpop.f32.mrb[0].mxu0
    %v122 = vadd.f32 %v43, %v121
    %123 = vmatprep.mubr.f32.mxu0 0.0
    %124 = vmatmul.mubr.f32.gmra.mrb[0].mxu0 %v51
    %v125 = vpop.f32.mrb[0].mxu0
    %v126 = vadd.f32 %v39, %v125
    %v127 = vpop.f32.mrb[0].mxu0
    %v128 = vadd.f32 %v43, %v127
    %129 = vdwg.mxu0
    %v130 = vld [vmem:[%s3] sm:$0xff]
    %v131 = vld [vmem:[%s3 + $0x8] sm:$0xff]
    %v132 = vld [vmem:[%s3 + $0x10] sm:$0xff]
    %v133 = vld [vmem:[%s3 + $0x18] sm:$0xff]
    %v134 = vld [vmem:[%s4] sm:$0xff]
    %v135 = vld [vmem:[%s4 + $0x8] sm:$0xff]
    %v136 = vld [vmem:[%s4 + $0x10] sm:$0xff]
    %v137 = vld [vmem:[%s4 + $0x18] sm:$0xff]
    %v139 = vsel %vm46, 0.0, 0
    %141 = vmatprep.subr.mxu0 0.0
    %142 = vmatpush1.msra.mxu0 %v130
    %143 = vmatprep.subr.mxu0 0.0
    %144 = vmatpush1.msra.mxu0 %v131
    %145 = vmatprep.subr.mxu0 0.0
    %146 = vmatpush1.msra.mxu0 %v132
    %147 = vmatprep.subr.mxu0 0.0
    %148 = vmatpush1.msra.mxu0 %v133
    %149 = vmatprep.subr.mxu0 0.0
    %150 = vmatpush1.msra.mxu0 0.0
    %151 = vmatprep.subr.mxu0 0.0
    %152 = vmatpush1.msra.mxu0 0.0
    %153 = vmatprep.subr.mxu0 0.0
    %154 = vmatpush1.msra.mxu0 0.0
    %155 = vmatprep.subr.mxu0 0.0
    %156 = vmatpush1.msra.mxu0 0.0
    %157 = vmatprep.subr.mxu0 0.0
    %158 = vmatpush1.msra.mxu0 0.0
    %159 = vmatprep.subr.mxu0 0.0
    %160 = vmatpush1.msra.mxu0 0.0
    %161 = vmatprep.subr.mxu0 0.0
    %162 = vmatpush1.msra.mxu0 0.0
    %163 = vmatprep.subr.mxu0 0.0
    %164 = vmatpush1.msra.mxu0 0.0
    %165 = vmatprep.subr.mxu0 0.0
    %166 = vmatpush1.msra.mxu0 0.0
    %167 = vmatprep.subr.mxu0 0.0
    %168 = vmatpush1.msra.mxu0 0.0
    %169 = vmatprep.subr.mxu0 0.0
    %170 = vmatpush1.msra.mxu0 0.0
    %171 = vmatprep.subr.mxu0 0.0
    %172 = vmatpush1.msra.mxu0 0.0
    %173 = vmatprep.subr.mxu0 0.0
    %174 = vmatpush1.msra.mxu0 0.0
    %175 = vmatprep.subr.mxu0 0.0
    %176 = vmatpush1.msra.mxu0 0.0
    %177 = vmatprep.subr.mxu0 0.0
    %178 = vmatpush1.msra.mxu0 0.0
    %179 = vmatprep.subr.mxu0 0.0
    %180 = vmatpush1.msra.mxu0 0.0
    %181 = vmatprep.subr.mxu0 0.0
    %182 = vmatpush1.msra.mxu0 0.0
    %183 = vmatprep.subr.mxu0 0.0
    %184 = vmatpush1.msra.mxu0 0.0
    %185 = vmatprep.subr.mxu0 0.0
    %186 = vmatpush1.msra.mxu0 0.0
    %187 = vmatprep.subr.mxu0 0.0
    %188 = vmatpush1.msra.mxu0 0.0
    %189 = vmatprep.subr.mxu0 0.0
    %190 = vmatpush1.msra.mxu0 0.0
    %191 = vmatprep.subr.mxu0 0.0
    %192 = vmatpush1.msra.mxu0 0.0
    %193 = vmatprep.subr.mxu0 0.0
    %194 = vmatpush1.msra.mxu0 0.0
    %195 = vmatprep.subr.mxu0 0.0
    %196 = vmatpush1.msra.mxu0 0.0
    %197 = vmatprep.subr.mxu0 0.0
    %198 = vmatpush1.msra.mxu0 0.0
    %199 = vmatprep.subr.mxu0 0.0
    %200 = vmatpush1.msra.mxu0 0.0
    %201 = vmatprep.subr.mxu0 0.0
    %202 = vmatpush1.msra.mxu0 0.0
    %203 = vmatprep.subr.mxu0 0.0
    %204 = vmatpush1.msra.mxu0 0.0
    %205 = vmatprep.mubr.f32.mxu0 0.0
    %206 = vmatmul.mubr.f32.gmra.mrb[0].mxu0 %v139
    %v207 = vpop.f32.mrb[0].mxu0
    %v208 = vadd.f32 0.0, %v207
    %v209 = vpop.f32.mrb[0].mxu0
    %210 = vdwg.mxu0
    %v211 = vadd.f32 %v120, %v208
    %212 = vmatprep.subr.mxu0 0.0
    %213 = vmatpush1.msra.mxu0 %v134
    %214 = vmatprep.subr.mxu0 0.0
    %215 = vmatpush1.msra.mxu0 %v135
    %216 = vmatprep.subr.mxu0 0.0
    %217 = vmatpush1.msra.mxu0 %v136
    %218 = vmatprep.subr.mxu0 0.0
    %219 = vmatpush1.msra.mxu0 %v137
    %220 = vmatprep.subr.mxu0 0.0
    %221 = vmatpush1.msra.mxu0 0.0
    %222 = vmatprep.subr.mxu0 0.0
    %223 = vmatpush1.msra.mxu0 0.0
    %224 = vmatprep.subr.mxu0 0.0
    %225 = vmatpush1.msra.mxu0 0.0
    %226 = vmatprep.subr.mxu0 0.0
    %227 = vmatpush1.msra.mxu0 0.0
    %228 = vmatprep.subr.mxu0 0.0
    %229 = vmatpush1.msra.mxu0 0.0
    %230 = vmatprep.subr.mxu0 0.0
    %231 = vmatpush1.msra.mxu0 0.0
    %232 = vmatprep.subr.mxu0 0.0
    %233 = vmatpush1.msra.mxu0 0.0
    %234 = vmatprep.subr.mxu0 0.0
    %235 = vmatpush1.msra.mxu0 0.0
    %236 = vmatprep.subr.mxu0 0.0
    %237 = vmatpush1.msra.mxu0 0.0
    %238 = vmatprep.subr.mxu0 0.0
    %239 = vmatpush1.msra.mxu0 0.0
    %240 = vmatprep.subr.mxu0 0.0
    %241 = vmatpush1.msra.mxu0 0.0
    %242 = vmatprep.subr.mxu0 0.0
    %243 = vmatpush1.msra.mxu0 0.0
    %244 = vmatprep.subr.mxu0 0.0
    %245 = vmatpush1.msra.mxu0 0.0
    %246 = vmatprep.subr.mxu0 0.0
    %247 = vmatpush1.msra.mxu0 0.0
    %248 = vmatprep.subr.mxu0 0.0
    %249 = vmatpush1.msra.mxu0 0.0
    %250 = vmatprep.subr.mxu0 0.0
    %251 = vmatpush1.msra.mxu0 0.0
    %252 = vmatprep.subr.mxu0 0.0
    %253 = vmatpush1.msra.mxu0 0.0
    %254 = vmatprep.subr.mxu0 0.0
    %255 = vmatpush1.msra.mxu0 0.0
    %256 = vmatprep.subr.mxu0 0.0
    %257 = vmatpush1.msra.mxu0 0.0
    %258 = vmatprep.subr.mxu0 0.0
    %259 = vmatpush1.msra.mxu0 0.0
    %260 = vmatprep.subr.mxu0 0.0
    %261 = vmatpush1.msra.mxu0 0.0
    %262 = vmatprep.subr.mxu0 0.0
    %263 = vmatpush1.msra.mxu0 0.0
    %264 = vmatprep.subr.mxu0 0.0
    %265 = vmatpush1.msra.mxu0 0.0
    %266 = vmatprep.subr.mxu0 0.0
    %267 = vmatpush1.msra.mxu0 0.0
    %268 = vmatprep.subr.mxu0 0.0
    %269 = vmatpush1.msra.mxu0 0.0
    %270 = vmatprep.subr.mxu0 0.0
    %271 = vmatpush1.msra.mxu0 0.0
    %272 = vmatprep.subr.mxu0 0.0
    %273 = vmatpush1.msra.mxu0 0.0
    %274 = vmatprep.subr.mxu0 0.0
    %275 = vmatpush1.msra.mxu0 0.0
    %276 = vmatprep.mubr.f32.mxu0 0.0
    %277 = vmatmul.mubr.f32.gmra.mrb[0].mxu0 %v139
    %v278 = vpop.f32.mrb[0].mxu0
    %v279 = vadd.f32 0.0, %v278
    %v280 = vpop.f32.mrb[0].mxu0
    %281 = vdwg.mxu0
    %v283 = vrot.slane %v279, 2
    %v285 = vadd.f32 %v128, %v283
    %v286 = vxor.u32 %v211, 2147483648
    %v287 = vmul.f32 %v286, 1.442695
    %v288 = vpow.pop %v287
    %v289 = vadd.f32 %v288, 1.0
    %v290 = vrcp.pop %v289
    %v291 = vmul.f32 1.0, %v290
    %v292 = vtanh.pop %v211
    %v293 = vmul.f32 %v291, 0.0
    %295 = vrot.lane.b32.xlu0 %v292, 64
    %v296 = vpop.permute.xlu0 %295
    %v298 = vmul.f32 %v291, %v296
    %300 = vrot.lane.b32.xlu0 %v298, 32
    %v301 = vpop.permute.xlu0 %300
    %v303 = vadd.f32 %v293, %v301
    %v304 = vtanh.pop %v303
    %306 = vrot.lane.b32.xlu0 %v304, 64
    %v307 = vpop.permute.xlu0 %306
    %v309 = vmul.f32 %v291, %v307
    %v310 = vxor.u32 %v285, 2147483648
    %v311 = vmul.f32 %v310, 1.442695
    %v312 = vpow.pop %v311
    %v313 = vadd.f32 %v312, 1.0
    %v314 = vrcp.pop %v313
    %v315 = vmul.f32 1.0, %v314
    %v316 = vtanh.pop %v285
    %v317 = vmul.f32 %v315, 0.0
    %319 = vrot.lane.b32.xlu0 %v316, 64
    %v320 = vpop.permute.xlu0 %319
    %v322 = vmul.f32 %v315, %v320
    %324 = vrot.lane.b32.xlu0 %v322, 32
    %v325 = vpop.permute.xlu0 %324
    %v327 = vadd.f32 %v317, %v325
    %v328 = vtanh.pop %v327
    %330 = vrot.lane.b32.xlu0 %v328, 64
    %v331 = vpop.permute.xlu0 %330
    %v333 = vmul.f32 %v315, %v331
    %v336 = vunpack.c.l.s4 1966171168
    %v337 = vunpack.c.0.s8 %v336
    %v338 = vlaneseq
    %v339 = vshrl.u32 %v338, 7
    %v340 = vsub.s32 %v337, %v339
    %v341 = vrot.slane %v309, %v340
    %v342 = vcombine.high %v341, %v341
    %v344 = vunpack.c.l.s4 1966171168
    %v345 = vunpack.c.0.s8 %v344
    %v346 = vlaneseq
    %v347 = vshrl.u32 %v346, 7
    %v348 = vsub.s32 %v345, %v347
    %v349 = vrot.slane %v341, %v348
    %v351 = vunpack.c.l.s4 1966171168
    %v352 = vunpack.c.0.s8 %v351
    %v353 = vlaneseq
    %v354 = vshrl.u32 %v353, 7
    %v355 = vsub.s32 %v352, %v354
    %v356 = vrot.slane %v342, %v355
    %v357 = vlaneseq
    %v358 = vshrl.u32 %v357, 7
    %v359 = vsub.s32 0, %v358
    %v360 = vrot.slane %v349, %v359
    %v361 = vlaneseq
    %v362 = vshrl.u32 %v361, 7
    %v363 = vsub.s32 0, %v362
    %v364 = vrot.slane %v356, %v363
    %365 = vrot.lane.b32.xlu0 %v360, 32
    %v366 = vpop.permute.xlu0 %365
    %367 = vrot.lane.b32.xlu0 %v364, 32
    %v368 = vpop.permute.xlu0 %367
    %vm371 = vcmask 253952
    %372 = vst.msk [vmem:[#allocation2] sm:$0x1] %vm371, %v366
    %373 = vst.msk [vmem:[#allocation2 + $0x8] sm:$0x1] %vm371, %v368
    %v375 = vcombine.high %v333, %v333
    %v377 = vunpack.c.l.s4 1966171168
    %v378 = vunpack.c.0.s8 %v377
    %v379 = vlaneseq
    %v380 = vshrl.u32 %v379, 7
    %v381 = vsub.s32 %v378, %v380
    %v382 = vrot.slane %v375, %v381
    %v383 = vcombine.high %v382, %v382
    %v385 = vunpack.c.l.s4 1966171168
    %v386 = vunpack.c.0.s8 %v385
    %v387 = vlaneseq
    %v388 = vshrl.u32 %v387, 7
    %v389 = vsub.s32 %v386, %v388
    %v390 = vrot.slane %v382, %v389
    %v392 = vunpack.c.l.s4 1966171168
    %v393 = vunpack.c.0.s8 %v392
    %v394 = vlaneseq
    %v395 = vshrl.u32 %v394, 7
    %v396 = vsub.s32 %v393, %v395
    %v397 = vrot.slane %v383, %v396
    %v398 = vcombine.high %v390, %v390
    %v399 = vcombine.high %v397, %v397
    %v400 = vlaneseq
    %v401 = vshrl.u32 %v400, 7
    %v402 = vsub.s32 0, %v401
    %v403 = vrot.slane %v398, %v402
    %v404 = vlaneseq
    %v405 = vshrl.u32 %v404, 7
    %v406 = vsub.s32 0, %v405
    %v407 = vrot.slane %v399, %v406
    %408 = vrot.lane.b32.xlu0 %v403, 64
    %v409 = vpop.permute.xlu0 %408
    %410 = vrot.lane.b32.xlu0 %v407, 64
    %v411 = vpop.permute.xlu0 %410
    %vm414 = vcmask 516352
    %415 = vst.msk [vmem:[#allocation2 + $0x7] sm:$0x1] %vm414, %v409
    %416 = vst.msk [vmem:[#allocation2 + $0xf] sm:$0x1] %vm414, %v411
    %417 = vrot.lane.b32.xlu0 %v309, 32
    %v418 = vpop.permute.xlu0 %417
    %v419 = vsel %vm46, %v418, 0
    %421 = vmatprep.subr.mxu0 0.0
    %422 = vmatpush1.msra.mxu0 %v130
    %423 = vmatprep.subr.mxu0 0.0
    %424 = vmatpush1.msra.mxu0 %v131
    %425 = vmatprep.subr.mxu0 0.0
    %426 = vmatpush1.msra.mxu0 %v132
    %427 = vmatprep.subr.mxu0 0.0
    %428 = vmatpush1.msra.mxu0 %v133
    %429 = vmatprep.subr.mxu0 0.0
    %430 = vmatpush1.msra.mxu0 0.0
    %431 = vmatprep.subr.mxu0 0.0
    %432 = vmatpush1.msra.mxu0 0.0
    %433 = vmatprep.subr.mxu0 0.0
    %434 = vmatpush1.msra.mxu0 0.0
    %435 = vmatprep.subr.mxu0 0.0
    %436 = vmatpush1.msra.mxu0 0.0
    %437 = vmatprep.subr.mxu0 0.0
    %438 = vmatpush1.msra.mxu0 0.0
    %439 = vmatprep.subr.mxu0 0.0
    %440 = vmatpush1.msra.mxu0 0.0
    %441 = vmatprep.subr.mxu0 0.0
    %442 = vmatpush1.msra.mxu0 0.0
    %443 = vmatprep.subr.mxu0 0.0
    %444 = vmatpush1.msra.mxu0 0.0
    %445 = vmatprep.subr.mxu0 0.0
    %446 = vmatpush1.msra.mxu0 0.0
    %447 = vmatprep.subr.mxu0 0.0
    %448 = vmatpush1.msra.mxu0 0.0
    %449 = vmatprep.subr.mxu0 0.0
    %450 = vmatpush1.msra.mxu0 0.0
    %451 = vmatprep.subr.mxu0 0.0
    %452 = vmatpush1.msra.mxu0 0.0
    %453 = vmatprep.subr.mxu0 0.0
    %454 = vmatpush1.msra.mxu0 0.0
    %455 = vmatprep.subr.mxu0 0.0
    %456 = vmatpush1.msra.mxu0 0.0
    %457 = vmatprep.subr.mxu0 0.0
    %458 = vmatpush1.msra.mxu0 0.0
    %459 = vmatprep.subr.mxu0 0.0
    %460 = vmatpush1.msra.mxu0 0.0
    %461 = vmatprep.subr.mxu0 0.0
    %462 = vmatpush1.msra.mxu0 0.0
    %463 = vmatprep.subr.mxu0 0.0
    %464 = vmatpush1.msra.mxu0 0.0
    %465 = vmatprep.subr.mxu0 0.0
    %466 = vmatpush1.msra.mxu0 0.0
    %467 = vmatprep.subr.mxu0 0.0
    %468 = vmatpush1.msra.mxu0 0.0
    %469 = vmatprep.subr.mxu0 0.0
    %470 = vmatpush1.msra.mxu0 0.0
    %471 = vmatprep.subr.mxu0 0.0
    %472 = vmatpush1.msra.mxu0 0.0
    %473 = vmatprep.subr.mxu0 0.0
    %474 = vmatpush1.msra.mxu0 0.0
    %475 = vmatprep.subr.mxu0 0.0
    %476 = vmatpush1.msra.mxu0 0.0
    %477 = vmatprep.subr.mxu0 0.0
    %478 = vmatpush1.msra.mxu0 0.0
    %479 = vmatprep.subr.mxu0 0.0
    %480 = vmatpush1.msra.mxu0 0.0
    %481 = vmatprep.subr.mxu0 0.0
    %482 = vmatpush1.msra.mxu0 0.0
    %483 = vmatprep.subr.mxu0 0.0
    %484 = vmatpush1.msra.mxu0 0.0
    %485 = vmatprep.mubr.f32.mxu0 0.0
    %486 = vmatmul.mubr.f32.gmra.mrb[0].mxu0 %v419
    %v487 = vpop.f32.mrb[0].mxu0
    %v488 = vadd.f32 0.0, %v487
    %v489 = vpop.f32.mrb[0].mxu0
    %490 = vdwg.mxu0
    %v492 = vrot.slane %v488, 6
    %v494 = vadd.f32 %v120, %v492
    %v495 = vrot.slane %v333, 6
    %496 = vrot.lane.b32.xlu0 %v495, 32
    %v497 = vpop.permute.xlu0 %496
    %v498 = vsel %vm46, %v497, 0
    %500 = vmatprep.subr.mxu0 0.0
    %501 = vmatpush1.msra.mxu0 %v134
    %502 = vmatprep.subr.mxu0 0.0
    %503 = vmatpush1.msra.mxu0 %v135
    %504 = vmatprep.subr.mxu0 0.0
    %505 = vmatpush1.msra.mxu0 %v136
    %506 = vmatprep.subr.mxu0 0.0
    %507 = vmatpush1.msra.mxu0 %v137
    %508 = vmatprep.subr.mxu0 0.0
    %509 = vmatpush1.msra.mxu0 0.0
    %510 = vmatprep.subr.mxu0 0.0
    %511 = vmatpush1.msra.mxu0 0.0
    %512 = vmatprep.subr.mxu0 0.0
    %513 = vmatpush1.msra.mxu0 0.0
    %514 = vmatprep.subr.mxu0 0.0
    %515 = vmatpush1.msra.mxu0 0.0
    %516 = vmatprep.subr.mxu0 0.0
    %517 = vmatpush1.msra.mxu0 0.0
    %518 = vmatprep.subr.mxu0 0.0
    %519 = vmatpush1.msra.mxu0 0.0
    %520 = vmatprep.subr.mxu0 0.0
    %521 = vmatpush1.msra.mxu0 0.0
    %522 = vmatprep.subr.mxu0 0.0
    %523 = vmatpush1.msra.mxu0 0.0
    %524 = vmatprep.subr.mxu0 0.0
    %525 = vmatpush1.msra.mxu0 0.0
    %526 = vmatprep.subr.mxu0 0.0
    %527 = vmatpush1.msra.mxu0 0.0
    %528 = vmatprep.subr.mxu0 0.0
    %529 = vmatpush1.msra.mxu0 0.0
    %530 = vmatprep.subr.mxu0 0.0
    %531 = vmatpush1.msra.mxu0 0.0
    %532 = vmatprep.subr.mxu0 0.0
    %533 = vmatpush1.msra.mxu0 0.0
    %534 = vmatprep.subr.mxu0 0.0
    %535 = vmatpush1.msra.mxu0 0.0
    %536 = vmatprep.subr.mxu0 0.0
    %537 = vmatpush1.msra.mxu0 0.0
    %538 = vmatprep.subr.mxu0 0.0
    %539 = vmatpush1.msra.mxu0 0.0
    %540 = vmatprep.subr.mxu0 0.0
    %541 = vmatpush1.msra.mxu0 0.0
    %542 = vmatprep.subr.mxu0 0.0
    %543 = vmatpush1.msra.mxu0 0.0
    %544 = vmatprep.subr.mxu0 0.0
    %545 = vmatpush1.msra.mxu0 0.0
    %546 = vmatprep.subr.mxu0 0.0
    %547 = vmatpush1.msra.mxu0 0.0
    %548 = vmatprep.subr.mxu0 0.0
    %549 = vmatpush1.msra.mxu0 0.0
    %550 = vmatprep.subr.mxu0 0.0
    %551 = vmatpush1.msra.mxu0 0.0
    %552 = vmatprep.subr.mxu0 0.0
    %553 = vmatpush1.msra.mxu0 0.0
    %554 = vmatprep.subr.mxu0 0.0
    %555 = vmatpush1.msra.mxu0 0.0
    %556 = vmatprep.subr.mxu0 0.0
    %557 = vmatpush1.msra.mxu0 0.0
    %558 = vmatprep.subr.mxu0 0.0
    %559 = vmatpush1.msra.mxu0 0.0
    %560 = vmatprep.subr.mxu0 0.0
    %561 = vmatpush1.msra.mxu0 0.0
    %562 = vmatprep.subr.mxu0 0.0
    %563 = vmatpush1.msra.mxu0 0.0
    %564 = vmatprep.mubr.f32.mxu0 0.0
    %565 = vmatmul.mubr.f32.gmra.mrb[0].mxu0 %v498
    %v566 = vpop.f32.mrb[0].mxu0
    %v567 = vadd.f32 0.0, %v566
    %v568 = vpop.f32.mrb[0].mxu0
    %569 = vdwg.mxu0
    %v571 = vrot.slane %v567, 4
    %v573 = vadd.f32 %v128, %v571
    %v574 = vxor.u32 %v494, 2147483648
    %v575 = vmul.f32 %v574, 1.442695
    %v576 = vpow.pop %v575
    %v577 = vadd.f32 %v576, 1.0
    %v578 = vrcp.pop %v577
    %v579 = vmul.f32 1.0, %v578
    %v580 = vtanh.pop %v494
    %v582 = vrot.slane %v303, 6
    %v584 = vmul.f32 %v579, %v582
    %586 = vrot.lane.b32.xlu0 %v580, 64
    %v587 = vpop.permute.xlu0 %586
    %v589 = vmul.f32 %v579, %v587
    %591 = vrot.lane.b32.xlu0 %v589, 32
    %v592 = vpop.permute.xlu0 %591
    %v594 = vadd.f32 %v584, %v592
    %v595 = vtanh.pop %v594
    %597 = vrot.lane.b32.xlu0 %v595, 64
    %v598 = vpop.permute.xlu0 %597
    %v600 = vmul.f32 %v579, %v598
    %v601 = vxor.u32 %v573, 2147483648
    %v602 = vmul.f32 %v601, 1.442695
    %v603 = vpow.pop %v602
    %v604 = vadd.f32 %v603, 1.0
    %v605 = vrcp.pop %v604
    %v606 = vmul.f32 1.0, %v605
    %v607 = vtanh.pop %v573
    %v609 = vrot.slane %v327, 2
    %v611 = vmul.f32 %v606, %v609
    %613 = vrot.lane.b32.xlu0 %v607, 64
    %v614 = vpop.permute.xlu0 %613
    %v616 = vmul.f32 %v606, %v614
    %618 = vrot.lane.b32.xlu0 %v616, 32
    %v619 = vpop.permute.xlu0 %618
    %v621 = vadd.f32 %v611, %v619
    %v622 = vtanh.pop %v621
    %624 = vrot.lane.b32.xlu0 %v622, 64
    %v625 = vpop.permute.xlu0 %624
    %v627 = vmul.f32 %v606, %v625
    %v630 = vunpack.c.l.s4 1966171168
    %v631 = vunpack.c.0.s8 %v630
    %v632 = vlaneseq
    %v633 = vshrl.u32 %v632, 7
    %v634 = vsub.s32 %v631, %v633
    %v635 = vrot.slane %v600, %v634
    %v636 = vcombine.high %v635, %v635
    %v638 = vunpack.c.l.s4 1966171168
    %v639 = vunpack.c.0.s8 %v638
    %v640 = vlaneseq
    %v641 = vshrl.u32 %v640, 7
    %v642 = vsub.s32 %v639, %v641
    %v643 = vrot.slane %v635, %v642
    %v645 = vunpack.c.l.s4 1966171168
    %v646 = vunpack.c.0.s8 %v645
    %v647 = vlaneseq
    %v648 = vshrl.u32 %v647, 7
    %v649 = vsub.s32 %v646, %v648
    %v650 = vrot.slane %v636, %v649
    %v651 = vcombine.high %v643, %v643
    %v652 = vcombine.high %v650, %v650
    %v653 = vlaneseq
    %v654 = vshrl.u32 %v653, 7
    %v655 = vsub.s32 0, %v654
    %v656 = vrot.slane %v651, %v655
    %v657 = vlaneseq
    %v658 = vshrl.u32 %v657, 7
    %v659 = vsub.s32 0, %v658
    %v660 = vrot.slane %v652, %v659
    %661 = vrot.lane.b32.xlu0 %v656, 32
    %v662 = vpop.permute.xlu0 %661
    %663 = vrot.lane.b32.xlu0 %v660, 32
    %v664 = vpop.permute.xlu0 %663
    %667 = vst.msk [vmem:[#allocation2 + $0x1] sm:$0x1] %vm371, %v662
    %668 = vst.msk [vmem:[#allocation2 + $0x9] sm:$0x1] %vm371, %v664
    %v670 = vcombine.high %v627, %v627
    %v672 = vunpack.c.l.s4 1966171168
    %v673 = vunpack.c.0.s8 %v672
    %v674 = vlaneseq
    %v675 = vshrl.u32 %v674, 7
    %v676 = vsub.s32 %v673, %v675
    %v677 = vrot.slane %v670, %v676
    %v678 = vcombine.high %v677, %v677
    %v680 = vunpack.c.l.s4 1966171168
    %v681 = vunpack.c.0.s8 %v680
    %v682 = vlaneseq
    %v683 = vshrl.u32 %v682, 7
    %v684 = vsub.s32 %v681, %v683
    %v685 = vrot.slane %v677, %v684
    %v687 = vunpack.c.l.s4 1966171168
    %v688 = vunpack.c.0.s8 %v687
    %v689 = vlaneseq
    %v690 = vshrl.u32 %v689, 7
    %v691 = vsub.s32 %v688, %v690
    %v692 = vrot.slane %v678, %v691
    %v693 = vlaneseq
    %v694 = vshrl.u32 %v693, 7
    %v695 = vsub.s32 0, %v694
    %v696 = vrot.slane %v685, %v695
    %v697 = vlaneseq
    %v698 = vshrl.u32 %v697, 7
    %v699 = vsub.s32 0, %v698
    %v700 = vrot.slane %v692, %v699
    %701 = vrot.lane.b32.xlu0 %v696, 64
    %v702 = vpop.permute.xlu0 %701
    %703 = vrot.lane.b32.xlu0 %v700, 64
    %v704 = vpop.permute.xlu0 %703
    %707 = vst.msk [vmem:[#allocation2 + $0x6] sm:$0x1] %vm414, %v702
    %708 = vst.msk [vmem:[#allocation2 + $0xe] sm:$0x1] %vm414, %v704
    %v709 = vrot.slane %v600, 2
    %710 = vrot.lane.b32.xlu0 %v709, 32
    %v711 = vpop.permute.xlu0 %710
    %v712 = vsel %vm46, %v711, 0
    %714 = vmatprep.subr.mxu0 0.0
    %715 = vmatpush1.msra.mxu0 %v130
    %716 = vmatprep.subr.mxu0 0.0
    %717 = vmatpush1.msra.mxu0 %v131
    %718 = vmatprep.subr.mxu0 0.0
    %719 = vmatpush1.msra.mxu0 %v132
    %720 = vmatprep.subr.mxu0 0.0
    %721 = vmatpush1.msra.mxu0 %v133
    %722 = vmatprep.subr.mxu0 0.0
    %723 = vmatpush1.msra.mxu0 0.0
    %724 = vmatprep.subr.mxu0 0.0
    %725 = vmatpush1.msra.mxu0 0.0
    %726 = vmatprep.subr.mxu0 0.0
    %727 = vmatpush1.msra.mxu0 0.0
    %728 = vmatprep.subr.mxu0 0.0
    %729 = vmatpush1.msra.mxu0 0.0
    %730 = vmatprep.subr.mxu0 0.0
    %731 = vmatpush1.msra.mxu0 0.0
    %732 = vmatprep.subr.mxu0 0.0
    %733 = vmatpush1.msra.mxu0 0.0
    %734 = vmatprep.subr.mxu0 0.0
    %735 = vmatpush1.msra.mxu0 0.0
    %736 = vmatprep.subr.mxu0 0.0
    %737 = vmatpush1.msra.mxu0 0.0
    %738 = vmatprep.subr.mxu0 0.0
    %739 = vmatpush1.msra.mxu0 0.0
    %740 = vmatprep.subr.mxu0 0.0
    %741 = vmatpush1.msra.mxu0 0.0
    %742 = vmatprep.subr.mxu0 0.0
    %743 = vmatpush1.msra.mxu0 0.0
    %744 = vmatprep.subr.mxu0 0.0
    %745 = vmatpush1.msra.mxu0 0.0
    %746 = vmatprep.subr.mxu0 0.0
    %747 = vmatpush1.msra.mxu0 0.0
    %748 = vmatprep.subr.mxu0 0.0
    %749 = vmatpush1.msra.mxu0 0.0
    %750 = vmatprep.subr.mxu0 0.0
    %751 = vmatpush1.msra.mxu0 0.0
    %752 = vmatprep.subr.mxu0 0.0
    %753 = vmatpush1.msra.mxu0 0.0
    %754 = vmatprep.subr.mxu0 0.0
    %755 = vmatpush1.msra.mxu0 0.0
    %756 = vmatprep.subr.mxu0 0.0
    %757 = vmatpush1.msra.mxu0 0.0
    %758 = vmatprep.subr.mxu0 0.0
    %759 = vmatpush1.msra.mxu0 0.0
    %760 = vmatprep.subr.mxu0 0.0
    %761 = vmatpush1.msra.mxu0 0.0
    %762 = vmatprep.subr.mxu0 0.0
    %763 = vmatpush1.msra.mxu0 0.0
    %764 = vmatprep.subr.mxu0 0.0
    %765 = vmatpush1.msra.mxu0 0.0
    %766 = vmatprep.subr.mxu0 0.0
    %767 = vmatpush1.msra.mxu0 0.0
    %768 = vmatprep.subr.mxu0 0.0
    %769 = vmatpush1.msra.mxu0 0.0
    %770 = vmatprep.subr.mxu0 0.0
    %771 = vmatpush1.msra.mxu0 0.0
    %772 = vmatprep.subr.mxu0 0.0
    %773 = vmatpush1.msra.mxu0 0.0
    %774 = vmatprep.subr.mxu0 0.0
    %775 = vmatpush1.msra.mxu0 0.0
    %776 = vmatprep.subr.mxu0 0.0
    %777 = vmatpush1.msra.mxu0 0.0
    %778 = vmatprep.mubr.f32.mxu0 0.0
    %779 = vmatmul.mubr.f32.gmra.mrb[0].mxu0 %v712
    %v780 = vpop.f32.mrb[0].mxu0
    %v781 = vadd.f32 0.0, %v780
    %v782 = vpop.f32.mrb[0].mxu0
    %783 = vdwg.mxu0
    %v785 = vrot.slane %v781, 4
    %v787 = vadd.f32 %v120, %v785
    %v788 = vrot.slane %v627, 4
    %789 = vrot.lane.b32.xlu0 %v788, 32
    %v790 = vpop.permute.xlu0 %789
    %v791 = vsel %vm46, %v790, 0
    %793 = vmatprep.subr.mxu0 0.0
    %794 = vmatpush1.msra.mxu0 %v134
    %795 = vmatprep.subr.mxu0 0.0
    %796 = vmatpush1.msra.mxu0 %v135
    %797 = vmatprep.subr.mxu0 0.0
    %798 = vmatpush1.msra.mxu0 %v136
    %799 = vmatprep.subr.mxu0 0.0
    %800 = vmatpush1.msra.mxu0 %v137
    %801 = vmatprep.subr.mxu0 0.0
    %802 = vmatpush1.msra.mxu0 0.0
    %803 = vmatprep.subr.mxu0 0.0
    %804 = vmatpush1.msra.mxu0 0.0
    %805 = vmatprep.subr.mxu0 0.0
    %806 = vmatpush1.msra.mxu0 0.0
    %807 = vmatprep.subr.mxu0 0.0
    %808 = vmatpush1.msra.mxu0 0.0
    %809 = vmatprep.subr.mxu0 0.0
    %810 = vmatpush1.msra.mxu0 0.0
    %811 = vmatprep.subr.mxu0 0.0
    %812 = vmatpush1.msra.mxu0 0.0
    %813 = vmatprep.subr.mxu0 0.0
    %814 = vmatpush1.msra.mxu0 0.0
    %815 = vmatprep.subr.mxu0 0.0
    %816 = vmatpush1.msra.mxu0 0.0
    %817 = vmatprep.subr.mxu0 0.0
    %818 = vmatpush1.msra.mxu0 0.0
    %819 = vmatprep.subr.mxu0 0.0
    %820 = vmatpush1.msra.mxu0 0.0
    %821 = vmatprep.subr.mxu0 0.0
    %822 = vmatpush1.msra.mxu0 0.0
    %823 = vmatprep.subr.mxu0 0.0
    %824 = vmatpush1.msra.mxu0 0.0
    %825 = vmatprep.subr.mxu0 0.0
    %826 = vmatpush1.msra.mxu0 0.0
    %827 = vmatprep.subr.mxu0 0.0
    %828 = vmatpush1.msra.mxu0 0.0
    %829 = vmatprep.subr.mxu0 0.0
    %830 = vmatpush1.msra.mxu0 0.0
    %831 = vmatprep.subr.mxu0 0.0
    %832 = vmatpush1.msra.mxu0 0.0
    %833 = vmatprep.subr.mxu0 0.0
    %834 = vmatpush1.msra.mxu0 0.0
    %835 = vmatprep.subr.mxu0 0.0
    %836 = vmatpush1.msra.mxu0 0.0
    %837 = vmatprep.subr.mxu0 0.0
    %838 = vmatpush1.msra.mxu0 0.0
    %839 = vmatprep.subr.mxu0 0.0
    %840 = vmatpush1.msra.mxu0 0.0
    %841 = vmatprep.subr.mxu0 0.0
    %842 = vmatpush1.msra.mxu0 0.0
    %843 = vmatprep.subr.mxu0 0.0
    %844 = vmatpush1.msra.mxu0 0.0
    %845 = vmatprep.subr.mxu0 0.0
    %846 = vmatpush1.msra.mxu0 0.0
    %847 = vmatprep.subr.mxu0 0.0
    %848 = vmatpush1.msra.mxu0 0.0
    %849 = vmatprep.subr.mxu0 0.0
    %850 = vmatpush1.msra.mxu0 0.0
    %851 = vmatprep.subr.mxu0 0.0
    %852 = vmatpush1.msra.mxu0 0.0
    %853 = vmatprep.subr.mxu0 0.0
    %854 = vmatpush1.msra.mxu0 0.0
    %855 = vmatprep.subr.mxu0 0.0
    %856 = vmatpush1.msra.mxu0 0.0
    %857 = vmatprep.mubr.f32.mxu0 0.0
    %858 = vmatmul.mubr.f32.gmra.mrb[0].mxu0 %v791
    %v859 = vpop.f32.mrb[0].mxu0
    %v860 = vadd.f32 0.0, %v859
    %v861 = vpop.f32.mrb[0].mxu0
    %862 = vdwg.mxu0
    %v864 = vrot.slane %v860, 6
    %v866 = vadd.f32 %v128, %v864
    %v867 = vxor.u32 %v787, 2147483648
    %v868 = vmul.f32 %v867, 1.442695
    %v869 = vpow.pop %v868
    %v870 = vadd.f32 %v869, 1.0
    %v871 = vrcp.pop %v870
    %v872 = vmul.f32 1.0, %v871
    %v873 = vtanh.pop %v787
    %v875 = vrot.slane %v594, 6
    %v877 = vmul.f32 %v872, %v875
    %879 = vrot.lane.b32.xlu0 %v873, 64
    %v880 = vpop.permute.xlu0 %879
    %v882 = vmul.f32 %v872, %v880
    %884 = vrot.lane.b32.xlu0 %v882, 32
    %v885 = vpop.permute.xlu0 %884
    %v887 = vadd.f32 %v877, %v885
    %v888 = vtanh.pop %v887
    %890 = vrot.lane.b32.xlu0 %v888, 64
    %v891 = vpop.permute.xlu0 %890
    %v893 = vmul.f32 %v872, %v891
    %v894 = vxor.u32 %v866, 2147483648
    %v895 = vmul.f32 %v894, 1.442695
    %v896 = vpow.pop %v895
    %v897 = vadd.f32 %v896, 1.0
    %v898 = vrcp.pop %v897
    %v899 = vmul.f32 1.0, %v898
    %v900 = vtanh.pop %v866
    %v902 = vrot.slane %v621, 2
    %v904 = vmul.f32 %v899, %v902
    %906 = vrot.lane.b32.xlu0 %v900, 64
    %v907 = vpop.permute.xlu0 %906
    %v909 = vmul.f32 %v899, %v907
    %911 = vrot.lane.b32.xlu0 %v909, 32
    %v912 = vpop.permute.xlu0 %911
    %v914 = vadd.f32 %v904, %v912
    %v915 = vtanh.pop %v914
    %917 = vrot.lane.b32.xlu0 %v915, 64
    %v918 = vpop.permute.xlu0 %917
    %v920 = vmul.f32 %v899, %v918
    %v922 = vcombine.high %v893, %v893
    %v924 = vunpack.c.l.s4 1966171168
    %v925 = vunpack.c.0.s8 %v924
    %v926 = vlaneseq
    %v927 = vshrl.u32 %v926, 7
    %v928 = vsub.s32 %v925, %v927
    %v929 = vrot.slane %v922, %v928
    %v930 = vcombine.high %v929, %v929
    %v932 = vunpack.c.l.s4 1966171168
    %v933 = vunpack.c.0.s8 %v932
    %v934 = vlaneseq
    %v935 = vshrl.u32 %v934, 7
    %v936 = vsub.s32 %v933, %v935
    %v937 = vrot.slane %v929, %v936
    %v939 = vunpack.c.l.s4 1966171168
    %v940 = vunpack.c.0.s8 %v939
    %v941 = vlaneseq
    %v942 = vshrl.u32 %v941, 7
    %v943 = vsub.s32 %v940, %v942
    %v944 = vrot.slane %v930, %v943
    %v945 = vlaneseq
    %v946 = vshrl.u32 %v945, 7
    %v947 = vsub.s32 0, %v946
    %v948 = vrot.slane %v937, %v947
    %v949 = vlaneseq
    %v950 = vshrl.u32 %v949, 7
    %v951 = vsub.s32 0, %v950
    %v952 = vrot.slane %v944, %v951
    %953 = vrot.lane.b32.xlu0 %v948, 32
    %v954 = vpop.permute.xlu0 %953
    %955 = vrot.lane.b32.xlu0 %v952, 32
    %v956 = vpop.permute.xlu0 %955
    %959 = vst.msk [vmem:[#allocation2 + $0x2] sm:$0x1] %vm371, %v954
    %960 = vst.msk [vmem:[#allocation2 + $0xa] sm:$0x1] %vm371, %v956
    %v963 = vunpack.c.l.s4 1966171168
    %v964 = vunpack.c.0.s8 %v963
    %v965 = vlaneseq
    %v966 = vshrl.u32 %v965, 7
    %v967 = vsub.s32 %v964, %v966
    %v968 = vrot.slane %v920, %v967
    %v969 = vcombine.high %v968, %v968
    %v971 = vunpack.c.l.s4 1966171168
    %v972 = vunpack.c.0.s8 %v971
    %v973 = vlaneseq
    %v974 = vshrl.u32 %v973, 7
    %v975 = vsub.s32 %v972, %v974
    %v976 = vrot.slane %v968, %v975
    %v978 = vunpack.c.l.s4 1966171168
    %v979 = vunpack.c.0.s8 %v978
    %v980 = vlaneseq
    %v981 = vshrl.u32 %v980, 7
    %v982 = vsub.s32 %v979, %v981
    %v983 = vrot.slane %v969, %v982
    %v984 = vcombine.high %v976, %v976
    %v985 = vcombine.high %v983, %v983
    %v986 = vlaneseq
    %v987 = vshrl.u32 %v986, 7
    %v988 = vsub.s32 0, %v987
    %v989 = vrot.slane %v984, %v988
    %v990 = vlaneseq
    %v991 = vshrl.u32 %v990, 7
    %v992 = vsub.s32 0, %v991
    %v993 = vrot.slane %v985, %v992
    %994 = vrot.lane.b32.xlu0 %v989, 64
    %v995 = vpop.permute.xlu0 %994
    %996 = vrot.lane.b32.xlu0 %v993, 64
    %v997 = vpop.permute.xlu0 %996
    %1000 = vst.msk [vmem:[#allocation2 + $0x5] sm:$0x1] %vm414, %v995
    %1001 = vst.msk [vmem:[#allocation2 + $0xd] sm:$0x1] %vm414, %v997
    %v1002 = vrot.slane %v893, 4
    %1003 = vrot.lane.b32.xlu0 %v1002, 32
    %v1004 = vpop.permute.xlu0 %1003
    %v1005 = vsel %vm46, %v1004, 0
    %1007 = vmatprep.subr.mxu0 0.0
    %1008 = vmatpush1.msra.mxu0 %v130
    %1009 = vmatprep.subr.mxu0 0.0
    %1010 = vmatpush1.msra.mxu0 %v131
    %1011 = vmatprep.subr.mxu0 0.0
    %1012 = vmatpush1.msra.mxu0 %v132
    %1013 = vmatprep.subr.mxu0 0.0
    %1014 = vmatpush1.msra.mxu0 %v133
    %1015 = vmatprep.subr.mxu0 0.0
    %1016 = vmatpush1.msra.mxu0 0.0
    %1017 = vmatprep.subr.mxu0 0.0
    %1018 = vmatpush1.msra.mxu0 0.0
    %1019 = vmatprep.subr.mxu0 0.0
    %1020 = vmatpush1.msra.mxu0 0.0
    %1021 = vmatprep.subr.mxu0 0.0
    %1022 = vmatpush1.msra.mxu0 0.0
    %1023 = vmatprep.subr.mxu0 0.0
    %1024 = vmatpush1.msra.mxu0 0.0
    %1025 = vmatprep.subr.mxu0 0.0
    %1026 = vmatpush1.msra.mxu0 0.0
    %1027 = vmatprep.subr.mxu0 0.0
    %1028 = vmatpush1.msra.mxu0 0.0
    %1029 = vmatprep.subr.mxu0 0.0
    %1030 = vmatpush1.msra.mxu0 0.0
    %1031 = vmatprep.subr.mxu0 0.0
    %1032 = vmatpush1.msra.mxu0 0.0
    %1033 = vmatprep.subr.mxu0 0.0
    %1034 = vmatpush1.msra.mxu0 0.0
    %1035 = vmatprep.subr.mxu0 0.0
    %1036 = vmatpush1.msra.mxu0 0.0
    %1037 = vmatprep.subr.mxu0 0.0
    %1038 = vmatpush1.msra.mxu0 0.0
    %1039 = vmatprep.subr.mxu0 0.0
    %1040 = vmatpush1.msra.mxu0 0.0
    %1041 = vmatprep.subr.mxu0 0.0
    %1042 = vmatpush1.msra.mxu0 0.0
    %1043 = vmatprep.subr.mxu0 0.0
    %1044 = vmatpush1.msra.mxu0 0.0
    %1045 = vmatprep.subr.mxu0 0.0
    %1046 = vmatpush1.msra.mxu0 0.0
    %1047 = vmatprep.subr.mxu0 0.0
    %1048 = vmatpush1.msra.mxu0 0.0
    %1049 = vmatprep.subr.mxu0 0.0
    %1050 = vmatpush1.msra.mxu0 0.0
    %1051 = vmatprep.subr.mxu0 0.0
    %1052 = vmatpush1.msra.mxu0 0.0
    %1053 = vmatprep.subr.mxu0 0.0
    %1054 = vmatpush1.msra.mxu0 0.0
    %1055 = vmatprep.subr.mxu0 0.0
    %1056 = vmatpush1.msra.mxu0 0.0
    %1057 = vmatprep.subr.mxu0 0.0
    %1058 = vmatpush1.msra.mxu0 0.0
    %1059 = vmatprep.subr.mxu0 0.0
    %1060 = vmatpush1.msra.mxu0 0.0
    %1061 = vmatprep.subr.mxu0 0.0
    %1062 = vmatpush1.msra.mxu0 0.0
    %1063 = vmatprep.subr.mxu0 0.0
    %1064 = vmatpush1.msra.mxu0 0.0
    %1065 = vmatprep.subr.mxu0 0.0
    %1066 = vmatpush1.msra.mxu0 0.0
    %1067 = vmatprep.subr.mxu0 0.0
    %1068 = vmatpush1.msra.mxu0 0.0
    %1069 = vmatprep.subr.mxu0 0.0
    %1070 = vmatpush1.msra.mxu0 0.0
    %1071 = vmatprep.mubr.f32.mxu0 0.0
    %1072 = vmatmul.mubr.f32.gmra.mrb[0].mxu0 %v1005
    %v1073 = vpop.f32.mrb[0].mxu0
    %v1074 = vadd.f32 0.0, %v1073
    %v1075 = vpop.f32.mrb[0].mxu0
    %1076 = vdwg.mxu0
    %v1078 = vrot.slane %v1074, 2
    %v1080 = vadd.f32 %v120, %v1078
    %v1081 = vrot.slane %v920, 2
    %1082 = vrot.lane.b32.xlu0 %v1081, 32
    %v1083 = vpop.permute.xlu0 %1082
    %v1084 = vsel %vm46, %v1083, 0
    %1086 = vmatprep.subr.mxu0 0.0
    %1087 = vmatpush1.msra.mxu0 %v134
    %1088 = vmatprep.subr.mxu0 0.0
    %1089 = vmatpush1.msra.mxu0 %v135
    %1090 = vmatprep.subr.mxu0 0.0
    %1091 = vmatpush1.msra.mxu0 %v136
    %1092 = vmatprep.subr.mxu0 0.0
    %1093 = vmatpush1.msra.mxu0 %v137
    %1094 = vmatprep.subr.mxu0 0.0
    %1095 = vmatpush1.msra.mxu0 0.0
    %1096 = vmatprep.subr.mxu0 0.0
    %1097 = vmatpush1.msra.mxu0 0.0
    %1098 = vmatprep.subr.mxu0 0.0
    %1099 = vmatpush1.msra.mxu0 0.0
    %1100 = vmatprep.subr.mxu0 0.0
    %1101 = vmatpush1.msra.mxu0 0.0
    %1102 = vmatprep.subr.mxu0 0.0
    %1103 = vmatpush1.msra.mxu0 0.0
    %1104 = vmatprep.subr.mxu0 0.0
    %1105 = vmatpush1.msra.mxu0 0.0
    %1106 = vmatprep.subr.mxu0 0.0
    %1107 = vmatpush1.msra.mxu0 0.0
    %1108 = vmatprep.subr.mxu0 0.0
    %1109 = vmatpush1.msra.mxu0 0.0
    %1110 = vmatprep.subr.mxu0 0.0
    %1111 = vmatpush1.msra.mxu0 0.0
    %1112 = vmatprep.subr.mxu0 0.0
    %1113 = vmatpush1.msra.mxu0 0.0
    %1114 = vmatprep.subr.mxu0 0.0
    %1115 = vmatpush1.msra.mxu0 0.0
    %1116 = vmatprep.subr.mxu0 0.0
    %1117 = vmatpush1.msra.mxu0 0.0
    %1118 = vmatprep.subr.mxu0 0.0
    %1119 = vmatpush1.msra.mxu0 0.0
    %1120 = vmatprep.subr.mxu0 0.0
    %1121 = vmatpush1.msra.mxu0 0.0
    %1122 = vmatprep.subr.mxu0 0.0
    %1123 = vmatpush1.msra.mxu0 0.0
    %1124 = vmatprep.subr.mxu0 0.0
    %1125 = vmatpush1.msra.mxu0 0.0
    %1126 = vmatprep.subr.mxu0 0.0
    %1127 = vmatpush1.msra.mxu0 0.0
    %1128 = vmatprep.subr.mxu0 0.0
    %1129 = vmatpush1.msra.mxu0 0.0
    %1130 = vmatprep.subr.mxu0 0.0
    %1131 = vmatpush1.msra.mxu0 0.0
    %1132 = vmatprep.subr.mxu0 0.0
    %1133 = vmatpush1.msra.mxu0 0.0
    %1134 = vmatprep.subr.mxu0 0.0
    %1135 = vmatpush1.msra.mxu0 0.0
    %1136 = vmatprep.subr.mxu0 0.0
    %1137 = vmatpush1.msra.mxu0 0.0
    %1138 = vmatprep.subr.mxu0 0.0
    %1139 = vmatpush1.msra.mxu0 0.0
    %1140 = vmatprep.subr.mxu0 0.0
    %1141 = vmatpush1.msra.mxu0 0.0
    %1142 = vmatprep.subr.mxu0 0.0
    %1143 = vmatpush1.msra.mxu0 0.0
    %1144 = vmatprep.subr.mxu0 0.0
    %1145 = vmatpush1.msra.mxu0 0.0
    %1146 = vmatprep.subr.mxu0 0.0
    %1147 = vmatpush1.msra.mxu0 0.0
    %1148 = vmatprep.subr.mxu0 0.0
    %1149 = vmatpush1.msra.mxu0 0.0
    %1150 = vmatprep.mubr.f32.mxu0 0.0
    %1151 = vmatmul.mubr.f32.gmra.mrb[0].mxu0 %v1084
    %v1152 = vpop.f32.mrb[0].mxu0
    %v1153 = vadd.f32 0.0, %v1152
    %v1154 = vpop.f32.mrb[0].mxu0
    %1155 = vdwg.mxu0
    %v1156 = vadd.f32 %v128, %v1153
    %v1157 = vxor.u32 %v1080, 2147483648
    %v1158 = vmul.f32 %v1157, 1.442695
    %v1159 = vpow.pop %v1158
    %v1160 = vadd.f32 %v1159, 1.0
    %v1161 = vrcp.pop %v1160
    %v1162 = vmul.f32 1.0, %v1161
    %v1163 = vtanh.pop %v1080
    %v1165 = vrot.slane %v887, 6
    %v1167 = vmul.f32 %v1162, %v1165
    %1169 = vrot.lane.b32.xlu0 %v1163, 64
    %v1170 = vpop.permute.xlu0 %1169
    %v1172 = vmul.f32 %v1162, %v1170
    %1174 = vrot.lane.b32.xlu0 %v1172, 32
    %v1175 = vpop.permute.xlu0 %1174
    %v1177 = vadd.f32 %v1167, %v1175
    %v1178 = vtanh.pop %v1177
    %1180 = vrot.lane.b32.xlu0 %v1178, 64
    %v1181 = vpop.permute.xlu0 %1180
    %v1183 = vmul.f32 %v1162, %v1181
    %v1184 = vxor.u32 %v1156, 2147483648
    %v1185 = vmul.f32 %v1184, 1.442695
    %v1186 = vpow.pop %v1185
    %v1187 = vadd.f32 %v1186, 1.0
    %v1188 = vrcp.pop %v1187
    %v1189 = vmul.f32 1.0, %v1188
    %v1190 = vtanh.pop %v1156
    %v1192 = vrot.slane %v914, 2
    %v1194 = vmul.f32 %v1189, %v1192
    %1196 = vrot.lane.b32.xlu0 %v1190, 64
    %v1197 = vpop.permute.xlu0 %1196
    %v1199 = vmul.f32 %v1189, %v1197
    %1201 = vrot.lane.b32.xlu0 %v1199, 32
    %v1202 = vpop.permute.xlu0 %1201
    %v1204 = vadd.f32 %v1194, %v1202
    %v1205 = vtanh.pop %v1204
    %1207 = vrot.lane.b32.xlu0 %v1205, 64
    %v1208 = vpop.permute.xlu0 %1207
    %v1210 = vmul.f32 %v1189, %v1208
    %v1212 = vcombine.high %v1183, %v1183
    %v1214 = vunpack.c.l.s4 1966171168
    %v1215 = vunpack.c.0.s8 %v1214
    %v1216 = vlaneseq
    %v1217 = vshrl.u32 %v1216, 7
    %v1218 = vsub.s32 %v1215, %v1217
    %v1219 = vrot.slane %v1212, %v1218
    %v1220 = vcombine.high %v1219, %v1219
    %v1222 = vunpack.c.l.s4 1966171168
    %v1223 = vunpack.c.0.s8 %v1222
    %v1224 = vlaneseq
    %v1225 = vshrl.u32 %v1224, 7
    %v1226 = vsub.s32 %v1223, %v1225
    %v1227 = vrot.slane %v1219, %v1226
    %v1229 = vunpack.c.l.s4 1966171168
    %v1230 = vunpack.c.0.s8 %v1229
    %v1231 = vlaneseq
    %v1232 = vshrl.u32 %v1231, 7
    %v1233 = vsub.s32 %v1230, %v1232
    %v1234 = vrot.slane %v1220, %v1233
    %v1235 = vcombine.high %v1227, %v1227
    %v1236 = vcombine.high %v1234, %v1234
    %v1237 = vlaneseq
    %v1238 = vshrl.u32 %v1237, 7
    %v1239 = vsub.s32 0, %v1238
    %v1240 = vrot.slane %v1235, %v1239
    %v1241 = vlaneseq
    %v1242 = vshrl.u32 %v1241, 7
    %v1243 = vsub.s32 0, %v1242
    %v1244 = vrot.slane %v1236, %v1243
    %1245 = vrot.lane.b32.xlu0 %v1240, 32
    %v1246 = vpop.permute.xlu0 %1245
    %1247 = vrot.lane.b32.xlu0 %v1244, 32
    %v1248 = vpop.permute.xlu0 %1247
    %1251 = vst.msk [vmem:[#allocation2 + $0x3] sm:$0x1] %vm371, %v1246
    %1252 = vst.msk [vmem:[#allocation2 + $0xb] sm:$0x1] %vm371, %v1248
    %v1255 = vunpack.c.l.s4 1966171168
    %v1256 = vunpack.c.0.s8 %v1255
    %v1257 = vlaneseq
    %v1258 = vshrl.u32 %v1257, 7
    %v1259 = vsub.s32 %v1256, %v1258
    %v1260 = vrot.slane %v1210, %v1259
    %v1261 = vcombine.high %v1260, %v1260
    %v1263 = vunpack.c.l.s4 1966171168
    %v1264 = vunpack.c.0.s8 %v1263
    %v1265 = vlaneseq
    %v1266 = vshrl.u32 %v1265, 7
    %v1267 = vsub.s32 %v1264, %v1266
    %v1268 = vrot.slane %v1260, %v1267
    %v1270 = vunpack.c.l.s4 1966171168
    %v1271 = vunpack.c.0.s8 %v1270
    %v1272 = vlaneseq
    %v1273 = vshrl.u32 %v1272, 7
    %v1274 = vsub.s32 %v1271, %v1273
    %v1275 = vrot.slane %v1261, %v1274
    %v1276 = vlaneseq
    %v1277 = vshrl.u32 %v1276, 7
    %v1278 = vsub.s32 0, %v1277
    %v1279 = vrot.slane %v1268, %v1278
    %v1280 = vlaneseq
    %v1281 = vshrl.u32 %v1280, 7
    %v1282 = vsub.s32 0, %v1281
    %v1283 = vrot.slane %v1275, %v1282
    %1284 = vrot.lane.b32.xlu0 %v1279, 64
    %v1285 = vpop.permute.xlu0 %1284
    %1286 = vrot.lane.b32.xlu0 %v1283, 64
    %v1287 = vpop.permute.xlu0 %1286
    %1290 = vst.msk [vmem:[#allocation2 + $0x4] sm:$0x1] %vm414, %v1285
    %1291 = vst.msk [vmem:[#allocation2 + $0xc] sm:$0x1] %vm414, %v1287
    %v1292 = vrot.slane %v1183, 6
    %1293 = vrot.lane.b32.xlu0 %v1292, 32
    %v1294 = vpop.permute.xlu0 %1293
    %v1295 = vsel %vm46, %v1294, 0
    %1297 = vmatprep.subr.mxu0 0.0
    %1298 = vmatpush1.msra.mxu0 %v130
    %1299 = vmatprep.subr.mxu0 0.0
    %1300 = vmatpush1.msra.mxu0 %v131
    %1301 = vmatprep.subr.mxu0 0.0
    %1302 = vmatpush1.msra.mxu0 %v132
    %1303 = vmatprep.subr.mxu0 0.0
    %1304 = vmatpush1.msra.mxu0 %v133
    %1305 = vmatprep.subr.mxu0 0.0
    %1306 = vmatpush1.msra.mxu0 0.0
    %1307 = vmatprep.subr.mxu0 0.0
    %1308 = vmatpush1.msra.mxu0 0.0
    %1309 = vmatprep.subr.mxu0 0.0
    %1310 = vmatpush1.msra.mxu0 0.0
    %1311 = vmatprep.subr.mxu0 0.0
    %1312 = vmatpush1.msra.mxu0 0.0
    %1313 = vmatprep.subr.mxu0 0.0
    %1314 = vmatpush1.msra.mxu0 0.0
    %1315 = vmatprep.subr.mxu0 0.0
    %1316 = vmatpush1.msra.mxu0 0.0
    %1317 = vmatprep.subr.mxu0 0.0
    %1318 = vmatpush1.msra.mxu0 0.0
    %1319 = vmatprep.subr.mxu0 0.0
    %1320 = vmatpush1.msra.mxu0 0.0
    %1321 = vmatprep.subr.mxu0 0.0
    %1322 = vmatpush1.msra.mxu0 0.0
    %1323 = vmatprep.subr.mxu0 0.0
    %1324 = vmatpush1.msra.mxu0 0.0
    %1325 = vmatprep.subr.mxu0 0.0
    %1326 = vmatpush1.msra.mxu0 0.0
    %1327 = vmatprep.subr.mxu0 0.0
    %1328 = vmatpush1.msra.mxu0 0.0
    %1329 = vmatprep.subr.mxu0 0.0
    %1330 = vmatpush1.msra.mxu0 0.0
    %1331 = vmatprep.subr.mxu0 0.0
    %1332 = vmatpush1.msra.mxu0 0.0
    %1333 = vmatprep.subr.mxu0 0.0
    %1334 = vmatpush1.msra.mxu0 0.0
    %1335 = vmatprep.subr.mxu0 0.0
    %1336 = vmatpush1.msra.mxu0 0.0
    %1337 = vmatprep.subr.mxu0 0.0
    %1338 = vmatpush1.msra.mxu0 0.0
    %1339 = vmatprep.subr.mxu0 0.0
    %1340 = vmatpush1.msra.mxu0 0.0
    %1341 = vmatprep.subr.mxu0 0.0
    %1342 = vmatpush1.msra.mxu0 0.0
    %1343 = vmatprep.subr.mxu0 0.0
    %1344 = vmatpush1.msra.mxu0 0.0
    %1345 = vmatprep.subr.mxu0 0.0
    %1346 = vmatpush1.msra.mxu0 0.0
    %1347 = vmatprep.subr.mxu0 0.0
    %1348 = vmatpush1.msra.mxu0 0.0
    %1349 = vmatprep.subr.mxu0 0.0
    %1350 = vmatpush1.msra.mxu0 0.0
    %1351 = vmatprep.subr.mxu0 0.0
    %1352 = vmatpush1.msra.mxu0 0.0
    %1353 = vmatprep.subr.mxu0 0.0
    %1354 = vmatpush1.msra.mxu0 0.0
    %1355 = vmatprep.subr.mxu0 0.0
    %1356 = vmatpush1.msra.mxu0 0.0
    %1357 = vmatprep.subr.mxu0 0.0
    %1358 = vmatpush1.msra.mxu0 0.0
    %1359 = vmatprep.subr.mxu0 0.0
    %1360 = vmatpush1.msra.mxu0 0.0
    %1361 = vmatprep.mubr.f32.mxu0 0.0
    %1362 = vmatmul.mubr.f32.gmra.mrb[0].mxu0 %v1295
    %v1363 = vpop.f32.mrb[0].mxu0
    %v1364 = vadd.f32 0.0, %v1363
    %v1365 = vpop.f32.mrb[0].mxu0
    %1366 = vdwg.mxu0
    %v1367 = vadd.f32 %v126, %v1364
    %1368 = vrot.lane.b32.xlu0 %v1210, 32
    %v1369 = vpop.permute.xlu0 %1368
    %v1370 = vsel %vm46, %v1369, 0
    %1372 = vmatprep.subr.mxu0 0.0
    %1373 = vmatpush1.msra.mxu0 %v134
    %1374 = vmatprep.subr.mxu0 0.0
    %1375 = vmatpush1.msra.mxu0 %v135
    %1376 = vmatprep.subr.mxu0 0.0
    %1377 = vmatpush1.msra.mxu0 %v136
    %1378 = vmatprep.subr.mxu0 0.0
    %1379 = vmatpush1.msra.mxu0 %v137
    %1380 = vmatprep.subr.mxu0 0.0
    %1381 = vmatpush1.msra.mxu0 0.0
    %1382 = vmatprep.subr.mxu0 0.0
    %1383 = vmatpush1.msra.mxu0 0.0
    %1384 = vmatprep.subr.mxu0 0.0
    %1385 = vmatpush1.msra.mxu0 0.0
    %1386 = vmatprep.subr.mxu0 0.0
    %1387 = vmatpush1.msra.mxu0 0.0
    %1388 = vmatprep.subr.mxu0 0.0
    %1389 = vmatpush1.msra.mxu0 0.0
    %1390 = vmatprep.subr.mxu0 0.0
    %1391 = vmatpush1.msra.mxu0 0.0
    %1392 = vmatprep.subr.mxu0 0.0
    %1393 = vmatpush1.msra.mxu0 0.0
    %1394 = vmatprep.subr.mxu0 0.0
    %1395 = vmatpush1.msra.mxu0 0.0
    %1396 = vmatprep.subr.mxu0 0.0
    %1397 = vmatpush1.msra.mxu0 0.0
    %1398 = vmatprep.subr.mxu0 0.0
    %1399 = vmatpush1.msra.mxu0 0.0
    %1400 = vmatprep.subr.mxu0 0.0
    %1401 = vmatpush1.msra.mxu0 0.0
    %1402 = vmatprep.subr.mxu0 0.0
    %1403 = vmatpush1.msra.mxu0 0.0
    %1404 = vmatprep.subr.mxu0 0.0
    %1405 = vmatpush1.msra.mxu0 0.0
    %1406 = vmatprep.subr.mxu0 0.0
    %1407 = vmatpush1.msra.mxu0 0.0
    %1408 = vmatprep.subr.mxu0 0.0
    %1409 = vmatpush1.msra.mxu0 0.0
    %1410 = vmatprep.subr.mxu0 0.0
    %1411 = vmatpush1.msra.mxu0 0.0
    %1412 = vmatprep.subr.mxu0 0.0
    %1413 = vmatpush1.msra.mxu0 0.0
    %1414 = vmatprep.subr.mxu0 0.0
    %1415 = vmatpush1.msra.mxu0 0.0
    %1416 = vmatprep.subr.mxu0 0.0
    %1417 = vmatpush1.msra.mxu0 0.0
    %1418 = vmatprep.subr.mxu0 0.0
    %1419 = vmatpush1.msra.mxu0 0.0
    %1420 = vmatprep.subr.mxu0 0.0
    %1421 = vmatpush1.msra.mxu0 0.0
    %1422 = vmatprep.subr.mxu0 0.0
    %1423 = vmatpush1.msra.mxu0 0.0
    %1424 = vmatprep.subr.mxu0 0.0
    %1425 = vmatpush1.msra.mxu0 0.0
    %1426 = vmatprep.subr.mxu0 0.0
    %1427 = vmatpush1.msra.mxu0 0.0
    %1428 = vmatprep.subr.mxu0 0.0
    %1429 = vmatpush1.msra.mxu0 0.0
    %1430 = vmatprep.subr.mxu0 0.0
    %1431 = vmatpush1.msra.mxu0 0.0
    %1432 = vmatprep.subr.mxu0 0.0
    %1433 = vmatpush1.msra.mxu0 0.0
    %1434 = vmatprep.subr.mxu0 0.0
    %1435 = vmatpush1.msra.mxu0 0.0
    %1436 = vmatprep.mubr.f32.mxu0 0.0
    %1437 = vmatmul.mubr.f32.gmra.mrb[0].mxu0 %v1370
    %v1438 = vpop.f32.mrb[0].mxu0
    %v1439 = vadd.f32 0.0, %v1438
    %v1440 = vpop.f32.mrb[0].mxu0
    %1441 = vdwg.mxu0
    %v1443 = vrot.slane %v1439, 2
    %v1445 = vadd.f32 %v122, %v1443
    %v1446 = vxor.u32 %v1367, 2147483648
    %v1447 = vmul.f32 %v1446, 1.442695
    %v1448 = vpow.pop %v1447
    %v1449 = vadd.f32 %v1448, 1.0
    %v1450 = vrcp.pop %v1449
    %v1451 = vmul.f32 1.0, %v1450
    %v1452 = vtanh.pop %v1367
    %v1454 = vrot.slane %v1177, 6
    %v1456 = vmul.f32 %v1451, %v1454
    %1458 = vrot.lane.b32.xlu0 %v1452, 64
    %v1459 = vpop.permute.xlu0 %1458
    %v1461 = vmul.f32 %v1451, %v1459
    %1463 = vrot.lane.b32.xlu0 %v1461, 32
    %v1464 = vpop.permute.xlu0 %1463
    %v1466 = vadd.f32 %v1456, %v1464
    %v1467 = vtanh.pop %v1466
    %1469 = vrot.lane.b32.xlu0 %v1467, 64
    %v1470 = vpop.permute.xlu0 %1469
    %v1472 = vmul.f32 %v1451, %v1470
    %v1473 = vxor.u32 %v1445, 2147483648
    %v1474 = vmul.f32 %v1473, 1.442695
    %v1475 = vpow.pop %v1474
    %v1476 = vadd.f32 %v1475, 1.0
    %v1477 = vrcp.pop %v1476
    %v1478 = vmul.f32 1.0, %v1477
    %v1479 = vtanh.pop %v1445
    %v1481 = vrot.slane %v1204, 2
    %v1483 = vmul.f32 %v1478, %v1481
    %1485 = vrot.lane.b32.xlu0 %v1479, 64
    %v1486 = vpop.permute.xlu0 %1485
    %v1488 = vmul.f32 %v1478, %v1486
    %1490 = vrot.lane.b32.xlu0 %v1488, 32
    %v1491 = vpop.permute.xlu0 %1490
    %v1493 = vadd.f32 %v1483, %v1491
    %v1494 = vtanh.pop %v1493
    %1496 = vrot.lane.b32.xlu0 %v1494, 64
    %v1497 = vpop.permute.xlu0 %1496
    %v1499 = vmul.f32 %v1478, %v1497
    %v1502 = vunpack.c.l.s4 1966171168
    %v1503 = vunpack.c.0.s8 %v1502
    %v1504 = vlaneseq
    %v1505 = vshrl.u32 %v1504, 7
    %v1506 = vsub.s32 %v1503, %v1505
    %v1507 = vrot.slane %v1472, %v1506
    %v1508 = vcombine.high %v1507, %v1507
    %v1510 = vunpack.c.l.s4 1966171168
    %v1511 = vunpack.c.0.s8 %v1510
    %v1512 = vlaneseq
    %v1513 = vshrl.u32 %v1512, 7
    %v1514 = vsub.s32 %v1511, %v1513
    %v1515 = vrot.slane %v1507, %v1514
    %v1517 = vunpack.c.l.s4 1966171168
    %v1518 = vunpack.c.0.s8 %v1517
    %v1519 = vlaneseq
    %v1520 = vshrl.u32 %v1519, 7
    %v1521 = vsub.s32 %v1518, %v1520
    %v1522 = vrot.slane %v1508, %v1521
    %v1523 = vlaneseq
    %v1524 = vshrl.u32 %v1523, 7
    %v1525 = vsub.s32 0, %v1524
    %v1526 = vrot.slane %v1515, %v1525
    %v1527 = vlaneseq
    %v1528 = vshrl.u32 %v1527, 7
    %v1529 = vsub.s32 0, %v1528
    %v1530 = vrot.slane %v1522, %v1529
    %1531 = vrot.lane.b32.xlu0 %v1526, 32
    %v1532 = vpop.permute.xlu0 %1531
    %1533 = vrot.lane.b32.xlu0 %v1530, 32
    %v1534 = vpop.permute.xlu0 %1533
    %1537 = vst.msk [vmem:[#allocation2 + $0x4] sm:$0x1] %vm371, %v1532
    %1538 = vst.msk [vmem:[#allocation2 + $0xc] sm:$0x1] %vm371, %v1534
    %v1540 = vcombine.high %v1499, %v1499
    %v1542 = vunpack.c.l.s4 1966171168
    %v1543 = vunpack.c.0.s8 %v1542
    %v1544 = vlaneseq
    %v1545 = vshrl.u32 %v1544, 7
    %v1546 = vsub.s32 %v1543, %v1545
    %v1547 = vrot.slane %v1540, %v1546
    %v1548 = vcombine.high %v1547, %v1547
    %v1550 = vunpack.c.l.s4 1966171168
    %v1551 = vunpack.c.0.s8 %v1550
    %v1552 = vlaneseq
    %v1553 = vshrl.u32 %v1552, 7
    %v1554 = vsub.s32 %v1551, %v1553
    %v1555 = vrot.slane %v1547, %v1554
    %v1557 = vunpack.c.l.s4 1966171168
    %v1558 = vunpack.c.0.s8 %v1557
    %v1559 = vlaneseq
    %v1560 = vshrl.u32 %v1559, 7
    %v1561 = vsub.s32 %v1558, %v1560
    %v1562 = vrot.slane %v1548, %v1561
    %v1563 = vcombine.high %v1555, %v1555
    %v1564 = vcombine.high %v1562, %v1562
    %v1565 = vlaneseq
    %v1566 = vshrl.u32 %v1565, 7
    %v1567 = vsub.s32 0, %v1566
    %v1568 = vrot.slane %v1563, %v1567
    %v1569 = vlaneseq
    %v1570 = vshrl.u32 %v1569, 7
    %v1571 = vsub.s32 0, %v1570
    %v1572 = vrot.slane %v1564, %v1571
    %1573 = vrot.lane.b32.xlu0 %v1568, 64
    %v1574 = vpop.permute.xlu0 %1573
    %1575 = vrot.lane.b32.xlu0 %v1572, 64
    %v1576 = vpop.permute.xlu0 %1575
    %1579 = vst.msk [vmem:[#allocation2 + $0x3] sm:$0x1] %vm414, %v1574
    %1580 = vst.msk [vmem:[#allocation2 + $0xb] sm:$0x1] %vm414, %v1576
    %1581 = vrot.lane.b32.xlu0 %v1472, 32
    %v1582 = vpop.permute.xlu0 %1581
    %v1583 = vsel %vm46, %v1582, 0
    %1585 = vmatprep.subr.mxu0 0.0
    %1586 = vmatpush1.msra.mxu0 %v130
    %1587 = vmatprep.subr.mxu0 0.0
    %1588 = vmatpush1.msra.mxu0 %v131
    %1589 = vmatprep.subr.mxu0 0.0
    %1590 = vmatpush1.msra.mxu0 %v132
    %1591 = vmatprep.subr.mxu0 0.0
    %1592 = vmatpush1.msra.mxu0 %v133
    %1593 = vmatprep.subr.mxu0 0.0
    %1594 = vmatpush1.msra.mxu0 0.0
    %1595 = vmatprep.subr.mxu0 0.0
    %1596 = vmatpush1.msra.mxu0 0.0
    %1597 = vmatprep.subr.mxu0 0.0
    %1598 = vmatpush1.msra.mxu0 0.0
    %1599 = vmatprep.subr.mxu0 0.0
    %1600 = vmatpush1.msra.mxu0 0.0
    %1601 = vmatprep.subr.mxu0 0.0
    %1602 = vmatpush1.msra.mxu0 0.0
    %1603 = vmatprep.subr.mxu0 0.0
    %1604 = vmatpush1.msra.mxu0 0.0
    %1605 = vmatprep.subr.mxu0 0.0
    %1606 = vmatpush1.msra.mxu0 0.0
    %1607 = vmatprep.subr.mxu0 0.0
    %1608 = vmatpush1.msra.mxu0 0.0
    %1609 = vmatprep.subr.mxu0 0.0
    %1610 = vmatpush1.msra.mxu0 0.0
    %1611 = vmatprep.subr.mxu0 0.0
    %1612 = vmatpush1.msra.mxu0 0.0
    %1613 = vmatprep.subr.mxu0 0.0
    %1614 = vmatpush1.msra.mxu0 0.0
    %1615 = vmatprep.subr.mxu0 0.0
    %1616 = vmatpush1.msra.mxu0 0.0
    %1617 = vmatprep.subr.mxu0 0.0
    %1618 = vmatpush1.msra.mxu0 0.0
    %1619 = vmatprep.subr.mxu0 0.0
    %1620 = vmatpush1.msra.mxu0 0.0
    %1621 = vmatprep.subr.mxu0 0.0
    %1622 = vmatpush1.msra.mxu0 0.0
    %1623 = vmatprep.subr.mxu0 0.0
    %1624 = vmatpush1.msra.mxu0 0.0
    %1625 = vmatprep.subr.mxu0 0.0
    %1626 = vmatpush1.msra.mxu0 0.0
    %1627 = vmatprep.subr.mxu0 0.0
    %1628 = vmatpush1.msra.mxu0 0.0
    %1629 = vmatprep.subr.mxu0 0.0
    %1630 = vmatpush1.msra.mxu0 0.0
    %1631 = vmatprep.subr.mxu0 0.0
    %1632 = vmatpush1.msra.mxu0 0.0
    %1633 = vmatprep.subr.mxu0 0.0
    %1634 = vmatpush1.msra.mxu0 0.0
    %1635 = vmatprep.subr.mxu0 0.0
    %1636 = vmatpush1.msra.mxu0 0.0
    %1637 = vmatprep.subr.mxu0 0.0
    %1638 = vmatpush1.msra.mxu0 0.0
    %1639 = vmatprep.subr.mxu0 0.0
    %1640 = vmatpush1.msra.mxu0 0.0
    %1641 = vmatprep.subr.mxu0 0.0
    %1642 = vmatpush1.msra.mxu0 0.0
    %1643 = vmatprep.subr.mxu0 0.0
    %1644 = vmatpush1.msra.mxu0 0.0
    %1645 = vmatprep.subr.mxu0 0.0
    %1646 = vmatpush1.msra.mxu0 0.0
    %1647 = vmatprep.subr.mxu0 0.0
    %1648 = vmatpush1.msra.mxu0 0.0
    %1649 = vmatprep.mubr.f32.mxu0 0.0
    %1650 = vmatmul.mubr.f32.gmra.mrb[0].mxu0 %v1583
    %v1651 = vpop.f32.mrb[0].mxu0
    %v1652 = vadd.f32 0.0, %v1651
    %v1653 = vpop.f32.mrb[0].mxu0
    %1654 = vdwg.mxu0
    %v1656 = vrot.slane %v1652, 6
    %v1658 = vadd.f32 %v126, %v1656
    %v1659 = vrot.slane %v1499, 6
    %1660 = vrot.lane.b32.xlu0 %v1659, 32
    %v1661 = vpop.permute.xlu0 %1660
    %v1662 = vsel %vm46, %v1661, 0
    %1664 = vmatprep.subr.mxu0 0.0
    %1665 = vmatpush1.msra.mxu0 %v134
    %1666 = vmatprep.subr.mxu0 0.0
    %1667 = vmatpush1.msra.mxu0 %v135
    %1668 = vmatprep.subr.mxu0 0.0
    %1669 = vmatpush1.msra.mxu0 %v136
    %1670 = vmatprep.subr.mxu0 0.0
    %1671 = vmatpush1.msra.mxu0 %v137
    %1672 = vmatprep.subr.mxu0 0.0
    %1673 = vmatpush1.msra.mxu0 0.0
    %1674 = vmatprep.subr.mxu0 0.0
    %1675 = vmatpush1.msra.mxu0 0.0
    %1676 = vmatprep.subr.mxu0 0.0
    %1677 = vmatpush1.msra.mxu0 0.0
    %1678 = vmatprep.subr.mxu0 0.0
    %1679 = vmatpush1.msra.mxu0 0.0
    %1680 = vmatprep.subr.mxu0 0.0
    %1681 = vmatpush1.msra.mxu0 0.0
    %1682 = vmatprep.subr.mxu0 0.0
    %1683 = vmatpush1.msra.mxu0 0.0
    %1684 = vmatprep.subr.mxu0 0.0
    %1685 = vmatpush1.msra.mxu0 0.0
    %1686 = vmatprep.subr.mxu0 0.0
    %1687 = vmatpush1.msra.mxu0 0.0
    %1688 = vmatprep.subr.mxu0 0.0
    %1689 = vmatpush1.msra.mxu0 0.0
    %1690 = vmatprep.subr.mxu0 0.0
    %1691 = vmatpush1.msra.mxu0 0.0
    %1692 = vmatprep.subr.mxu0 0.0
    %1693 = vmatpush1.msra.mxu0 0.0
    %1694 = vmatprep.subr.mxu0 0.0
    %1695 = vmatpush1.msra.mxu0 0.0
    %1696 = vmatprep.subr.mxu0 0.0
    %1697 = vmatpush1.msra.mxu0 0.0
    %1698 = vmatprep.subr.mxu0 0.0
    %1699 = vmatpush1.msra.mxu0 0.0
    %1700 = vmatprep.subr.mxu0 0.0
    %1701 = vmatpush1.msra.mxu0 0.0
    %1702 = vmatprep.subr.mxu0 0.0
    %1703 = vmatpush1.msra.mxu0 0.0
    %1704 = vmatprep.subr.mxu0 0.0
    %1705 = vmatpush1.msra.mxu0 0.0
    %1706 = vmatprep.subr.mxu0 0.0
    %1707 = vmatpush1.msra.mxu0 0.0
    %1708 = vmatprep.subr.mxu0 0.0
    %1709 = vmatpush1.msra.mxu0 0.0
    %1710 = vmatprep.subr.mxu0 0.0
    %1711 = vmatpush1.msra.mxu0 0.0
    %1712 = vmatprep.subr.mxu0 0.0
    %1713 = vmatpush1.msra.mxu0 0.0
    %1714 = vmatprep.subr.mxu0 0.0
    %1715 = vmatpush1.msra.mxu0 0.0
    %1716 = vmatprep.subr.mxu0 0.0
    %1717 = vmatpush1.msra.mxu0 0.0
    %1718 = vmatprep.subr.mxu0 0.0
    %1719 = vmatpush1.msra.mxu0 0.0
    %1720 = vmatprep.subr.mxu0 0.0
    %1721 = vmatpush1.msra.mxu0 0.0
    %1722 = vmatprep.subr.mxu0 0.0
    %1723 = vmatpush1.msra.mxu0 0.0
    %1724 = vmatprep.subr.mxu0 0.0
    %1725 = vmatpush1.msra.mxu0 0.0
    %1726 = vmatprep.subr.mxu0 0.0
    %1727 = vmatpush1.msra.mxu0 0.0
    %1728 = vmatprep.mubr.f32.mxu0 0.0
    %1729 = vmatmul.mubr.f32.gmra.mrb[0].mxu0 %v1662
    %v1730 = vpop.f32.mrb[0].mxu0
    %v1731 = vadd.f32 0.0, %v1730
    %v1732 = vpop.f32.mrb[0].mxu0
    %1733 = vdwg.mxu0
    %v1735 = vrot.slane %v1731, 4
    %v1737 = vadd.f32 %v122, %v1735
    %v1738 = vxor.u32 %v1658, 2147483648
    %v1739 = vmul.f32 %v1738, 1.442695
    %v1740 = vpow.pop %v1739
    %v1741 = vadd.f32 %v1740, 1.0
    %v1742 = vrcp.pop %v1741
    %v1743 = vmul.f32 1.0, %v1742
    %v1744 = vtanh.pop %v1658
    %v1746 = vrot.slane %v1466, 6
    %v1748 = vmul.f32 %v1743, %v1746
    %1750 = vrot.lane.b32.xlu0 %v1744, 64
    %v1751 = vpop.permute.xlu0 %1750
    %v1753 = vmul.f32 %v1743, %v1751
    %1755 = vrot.lane.b32.xlu0 %v1753, 32
    %v1756 = vpop.permute.xlu0 %1755
    %v1758 = vadd.f32 %v1748, %v1756
    %v1759 = vtanh.pop %v1758
    %1761 = vrot.lane.b32.xlu0 %v1759, 64
    %v1762 = vpop.permute.xlu0 %1761
    %v1764 = vmul.f32 %v1743, %v1762
    %v1765 = vxor.u32 %v1737, 2147483648
    %v1766 = vmul.f32 %v1765, 1.442695
    %v1767 = vpow.pop %v1766
    %v1768 = vadd.f32 %v1767, 1.0
    %v1769 = vrcp.pop %v1768
    %v1770 = vmul.f32 1.0, %v1769
    %v1771 = vtanh.pop %v1737
    %v1773 = vrot.slane %v1493, 2
    %v1775 = vmul.f32 %v1770, %v1773
    %1777 = vrot.lane.b32.xlu0 %v1771, 64
    %v1778 = vpop.permute.xlu0 %1777
    %v1780 = vmul.f32 %v1770, %v1778
    %1782 = vrot.lane.b32.xlu0 %v1780, 32
    %v1783 = vpop.permute.xlu0 %1782
    %v1785 = vadd.f32 %v1775, %v1783
    %v1786 = vtanh.pop %v1785
    %1788 = vrot.lane.b32.xlu0 %v1786, 64
    %v1789 = vpop.permute.xlu0 %1788
    %v1791 = vmul.f32 %v1770, %v1789
    %v1794 = vunpack.c.l.s4 1966171168
    %v1795 = vunpack.c.0.s8 %v1794
    %v1796 = vlaneseq
    %v1797 = vshrl.u32 %v1796, 7
    %v1798 = vsub.s32 %v1795, %v1797
    %v1799 = vrot.slane %v1764, %v1798
    %v1800 = vcombine.high %v1799, %v1799
    %v1802 = vunpack.c.l.s4 1966171168
    %v1803 = vunpack.c.0.s8 %v1802
    %v1804 = vlaneseq
    %v1805 = vshrl.u32 %v1804, 7
    %v1806 = vsub.s32 %v1803, %v1805
    %v1807 = vrot.slane %v1799, %v1806
    %v1809 = vunpack.c.l.s4 1966171168
    %v1810 = vunpack.c.0.s8 %v1809
    %v1811 = vlaneseq
    %v1812 = vshrl.u32 %v1811, 7
    %v1813 = vsub.s32 %v1810, %v1812
    %v1814 = vrot.slane %v1800, %v1813
    %v1815 = vcombine.high %v1807, %v1807
    %v1816 = vcombine.high %v1814, %v1814
    %v1817 = vlaneseq
    %v1818 = vshrl.u32 %v1817, 7
    %v1819 = vsub.s32 0, %v1818
    %v1820 = vrot.slane %v1815, %v1819
    %v1821 = vlaneseq
    %v1822 = vshrl.u32 %v1821, 7
    %v1823 = vsub.s32 0, %v1822
    %v1824 = vrot.slane %v1816, %v1823
    %1825 = vrot.lane.b32.xlu0 %v1820, 32
    %v1826 = vpop.permute.xlu0 %1825
    %1827 = vrot.lane.b32.xlu0 %v1824, 32
    %v1828 = vpop.permute.xlu0 %1827
    %1831 = vst.msk [vmem:[#allocation2 + $0x5] sm:$0x1] %vm371, %v1826
    %1832 = vst.msk [vmem:[#allocation2 + $0xd] sm:$0x1] %vm371, %v1828
    %v1834 = vcombine.high %v1791, %v1791
    %v1836 = vunpack.c.l.s4 1966171168
    %v1837 = vunpack.c.0.s8 %v1836
    %v1838 = vlaneseq
    %v1839 = vshrl.u32 %v1838, 7
    %v1840 = vsub.s32 %v1837, %v1839
    %v1841 = vrot.slane %v1834, %v1840
    %v1842 = vcombine.high %v1841, %v1841
    %v1844 = vunpack.c.l.s4 1966171168
    %v1845 = vunpack.c.0.s8 %v1844
    %v1846 = vlaneseq
    %v1847 = vshrl.u32 %v1846, 7
    %v1848 = vsub.s32 %v1845, %v1847
    %v1849 = vrot.slane %v1841, %v1848
    %v1851 = vunpack.c.l.s4 1966171168
    %v1852 = vunpack.c.0.s8 %v1851
    %v1853 = vlaneseq
    %v1854 = vshrl.u32 %v1853, 7
    %v1855 = vsub.s32 %v1852, %v1854
    %v1856 = vrot.slane %v1842, %v1855
    %v1857 = vlaneseq
    %v1858 = vshrl.u32 %v1857, 7
    %v1859 = vsub.s32 0, %v1858
    %v1860 = vrot.slane %v1849, %v1859
    %v1861 = vlaneseq
    %v1862 = vshrl.u32 %v1861, 7
    %v1863 = vsub.s32 0, %v1862
    %v1864 = vrot.slane %v1856, %v1863
    %1865 = vrot.lane.b32.xlu0 %v1860, 64
    %v1866 = vpop.permute.xlu0 %1865
    %1867 = vrot.lane.b32.xlu0 %v1864, 64
    %v1868 = vpop.permute.xlu0 %1867
    %1871 = vst.msk [vmem:[#allocation2 + $0x2] sm:$0x1] %vm414, %v1866
    %1872 = vst.msk [vmem:[#allocation2 + $0xa] sm:$0x1] %vm414, %v1868
    %v1873 = vrot.slane %v1764, 2
    %1874 = vrot.lane.b32.xlu0 %v1873, 32
    %v1875 = vpop.permute.xlu0 %1874
    %v1876 = vsel %vm46, %v1875, 0
    %1878 = vmatprep.subr.mxu0 0.0
    %1879 = vmatpush1.msra.mxu0 %v130
    %1880 = vmatprep.subr.mxu0 0.0
    %1881 = vmatpush1.msra.mxu0 %v131
    %1882 = vmatprep.subr.mxu0 0.0
    %1883 = vmatpush1.msra.mxu0 %v132
    %1884 = vmatprep.subr.mxu0 0.0
    %1885 = vmatpush1.msra.mxu0 %v133
    %1886 = vmatprep.subr.mxu0 0.0
    %1887 = vmatpush1.msra.mxu0 0.0
    %1888 = vmatprep.subr.mxu0 0.0
    %1889 = vmatpush1.msra.mxu0 0.0
    %1890 = vmatprep.subr.mxu0 0.0
    %1891 = vmatpush1.msra.mxu0 0.0
    %1892 = vmatprep.subr.mxu0 0.0
    %1893 = vmatpush1.msra.mxu0 0.0
    %1894 = vmatprep.subr.mxu0 0.0
    %1895 = vmatpush1.msra.mxu0 0.0
    %1896 = vmatprep.subr.mxu0 0.0
    %1897 = vmatpush1.msra.mxu0 0.0
    %1898 = vmatprep.subr.mxu0 0.0
    %1899 = vmatpush1.msra.mxu0 0.0
    %1900 = vmatprep.subr.mxu0 0.0
    %1901 = vmatpush1.msra.mxu0 0.0
    %1902 = vmatprep.subr.mxu0 0.0
    %1903 = vmatpush1.msra.mxu0 0.0
    %1904 = vmatprep.subr.mxu0 0.0
    %1905 = vmatpush1.msra.mxu0 0.0
    %1906 = vmatprep.subr.mxu0 0.0
    %1907 = vmatpush1.msra.mxu0 0.0
    %1908 = vmatprep.subr.mxu0 0.0
    %1909 = vmatpush1.msra.mxu0 0.0
    %1910 = vmatprep.subr.mxu0 0.0
    %1911 = vmatpush1.msra.mxu0 0.0
    %1912 = vmatprep.subr.mxu0 0.0
    %1913 = vmatpush1.msra.mxu0 0.0
    %1914 = vmatprep.subr.mxu0 0.0
    %1915 = vmatpush1.msra.mxu0 0.0
    %1916 = vmatprep.subr.mxu0 0.0
    %1917 = vmatpush1.msra.mxu0 0.0
    %1918 = vmatprep.subr.mxu0 0.0
    %1919 = vmatpush1.msra.mxu0 0.0
    %1920 = vmatprep.subr.mxu0 0.0
    %1921 = vmatpush1.msra.mxu0 0.0
    %1922 = vmatprep.subr.mxu0 0.0
    %1923 = vmatpush1.msra.mxu0 0.0
    %1924 = vmatprep.subr.mxu0 0.0
    %1925 = vmatpush1.msra.mxu0 0.0
    %1926 = vmatprep.subr.mxu0 0.0
    %1927 = vmatpush1.msra.mxu0 0.0
    %1928 = vmatprep.subr.mxu0 0.0
    %1929 = vmatpush1.msra.mxu0 0.0
    %1930 = vmatprep.subr.mxu0 0.0
    %1931 = vmatpush1.msra.mxu0 0.0
    %1932 = vmatprep.subr.mxu0 0.0
    %1933 = vmatpush1.msra.mxu0 0.0
    %1934 = vmatprep.subr.mxu0 0.0
    %1935 = vmatpush1.msra.mxu0 0.0
    %1936 = vmatprep.subr.mxu0 0.0
    %1937 = vmatpush1.msra.mxu0 0.0
    %1938 = vmatprep.subr.mxu0 0.0
    %1939 = vmatpush1.msra.mxu0 0.0
    %1940 = vmatprep.subr.mxu0 0.0
    %1941 = vmatpush1.msra.mxu0 0.0
    %1942 = vmatprep.mubr.f32.mxu0 0.0
    %1943 = vmatmul.mubr.f32.gmra.mrb[0].mxu0 %v1876
    %v1944 = vpop.f32.mrb[0].mxu0
    %v1945 = vadd.f32 0.0, %v1944
    %v1946 = vpop.f32.mrb[0].mxu0
    %1947 = vdwg.mxu0
    %v1949 = vrot.slane %v1945, 4
    %v1951 = vadd.f32 %v126, %v1949
    %v1952 = vrot.slane %v1791, 4
    %1953 = vrot.lane.b32.xlu0 %v1952, 32
    %v1954 = vpop.permute.xlu0 %1953
    %v1955 = vsel %vm46, %v1954, 0
    %1957 = vmatprep.subr.mxu0 0.0
    %1958 = vmatpush1.msra.mxu0 %v134
    %1959 = vmatprep.subr.mxu0 0.0
    %1960 = vmatpush1.msra.mxu0 %v135
    %1961 = vmatprep.subr.mxu0 0.0
    %1962 = vmatpush1.msra.mxu0 %v136
    %1963 = vmatprep.subr.mxu0 0.0
    %1964 = vmatpush1.msra.mxu0 %v137
    %1965 = vmatprep.subr.mxu0 0.0
    %1966 = vmatpush1.msra.mxu0 0.0
    %1967 = vmatprep.subr.mxu0 0.0
    %1968 = vmatpush1.msra.mxu0 0.0
    %1969 = vmatprep.subr.mxu0 0.0
    %1970 = vmatpush1.msra.mxu0 0.0
    %1971 = vmatprep.subr.mxu0 0.0
    %1972 = vmatpush1.msra.mxu0 0.0
    %1973 = vmatprep.subr.mxu0 0.0
    %1974 = vmatpush1.msra.mxu0 0.0
    %1975 = vmatprep.subr.mxu0 0.0
    %1976 = vmatpush1.msra.mxu0 0.0
    %1977 = vmatprep.subr.mxu0 0.0
    %1978 = vmatpush1.msra.mxu0 0.0
    %1979 = vmatprep.subr.mxu0 0.0
    %1980 = vmatpush1.msra.mxu0 0.0
    %1981 = vmatprep.subr.mxu0 0.0
    %1982 = vmatpush1.msra.mxu0 0.0
    %1983 = vmatprep.subr.mxu0 0.0
    %1984 = vmatpush1.msra.mxu0 0.0
    %1985 = vmatprep.subr.mxu0 0.0
    %1986 = vmatpush1.msra.mxu0 0.0
    %1987 = vmatprep.subr.mxu0 0.0
    %1988 = vmatpush1.msra.mxu0 0.0
    %1989 = vmatprep.subr.mxu0 0.0
    %1990 = vmatpush1.msra.mxu0 0.0
    %1991 = vmatprep.subr.mxu0 0.0
    %1992 = vmatpush1.msra.mxu0 0.0
    %1993 = vmatprep.subr.mxu0 0.0
    %1994 = vmatpush1.msra.mxu0 0.0
    %1995 = vmatprep.subr.mxu0 0.0
    %1996 = vmatpush1.msra.mxu0 0.0
    %1997 = vmatprep.subr.mxu0 0.0
    %1998 = vmatpush1.msra.mxu0 0.0
    %1999 = vmatprep.subr.mxu0 0.0
    %2000 = vmatpush1.msra.mxu0 0.0
    %2001 = vmatprep.subr.mxu0 0.0
    %2002 = vmatpush1.msra.mxu0 0.0
    %2003 = vmatprep.subr.mxu0 0.0
    %2004 = vmatpush1.msra.mxu0 0.0
    %2005 = vmatprep.subr.mxu0 0.0
    %2006 = vmatpush1.msra.mxu0 0.0
    %2007 = vmatprep.subr.mxu0 0.0
    %2008 = vmatpush1.msra.mxu0 0.0
    %2009 = vmatprep.subr.mxu0 0.0
    %2010 = vmatpush1.msra.mxu0 0.0
    %2011 = vmatprep.subr.mxu0 0.0
    %2012 = vmatpush1.msra.mxu0 0.0
    %2013 = vmatprep.subr.mxu0 0.0
    %2014 = vmatpush1.msra.mxu0 0.0
    %2015 = vmatprep.subr.mxu0 0.0
    %2016 = vmatpush1.msra.mxu0 0.0
    %2017 = vmatprep.subr.mxu0 0.0
    %2018 = vmatpush1.msra.mxu0 0.0
    %2019 = vmatprep.subr.mxu0 0.0
    %2020 = vmatpush1.msra.mxu0 0.0
    %2021 = vmatprep.mubr.f32.mxu0 0.0
    %2022 = vmatmul.mubr.f32.gmra.mrb[0].mxu0 %v1955
    %v2023 = vpop.f32.mrb[0].mxu0
    %v2024 = vadd.f32 0.0, %v2023
    %v2025 = vpop.f32.mrb[0].mxu0
    %2026 = vdwg.mxu0
    %v2028 = vrot.slane %v2024, 6
    %v2030 = vadd.f32 %v122, %v2028
    %v2031 = vxor.u32 %v1951, 2147483648
    %v2032 = vmul.f32 %v2031, 1.442695
    %v2033 = vpow.pop %v2032
    %v2034 = vadd.f32 %v2033, 1.0
    %v2035 = vrcp.pop %v2034
    %v2036 = vmul.f32 1.0, %v2035
    %v2037 = vtanh.pop %v1951
    %v2039 = vrot.slane %v1758, 6
    %v2041 = vmul.f32 %v2036, %v2039
    %2043 = vrot.lane.b32.xlu0 %v2037, 64
    %v2044 = vpop.permute.xlu0 %2043
    %v2046 = vmul.f32 %v2036, %v2044
    %2048 = vrot.lane.b32.xlu0 %v2046, 32
    %v2049 = vpop.permute.xlu0 %2048
    %v2051 = vadd.f32 %v2041, %v2049
    %v2052 = vtanh.pop %v2051
    %2054 = vrot.lane.b32.xlu0 %v2052, 64
    %v2055 = vpop.permute.xlu0 %2054
    %v2057 = vmul.f32 %v2036, %v2055
    %v2058 = vxor.u32 %v2030, 2147483648
    %v2059 = vmul.f32 %v2058, 1.442695
    %v2060 = vpow.pop %v2059
    %v2061 = vadd.f32 %v2060, 1.0
    %v2062 = vrcp.pop %v2061
    %v2063 = vmul.f32 1.0, %v2062
    %v2064 = vtanh.pop %v2030
    %v2066 = vrot.slane %v1785, 2
    %v2068 = vmul.f32 %v2063, %v2066
    %2070 = vrot.lane.b32.xlu0 %v2064, 64
    %v2071 = vpop.permute.xlu0 %2070
    %v2073 = vmul.f32 %v2063, %v2071
    %2075 = vrot.lane.b32.xlu0 %v2073, 32
    %v2076 = vpop.permute.xlu0 %2075
    %v2078 = vadd.f32 %v2068, %v2076
    %v2079 = vtanh.pop %v2078
    %2081 = vrot.lane.b32.xlu0 %v2079, 64
    %v2082 = vpop.permute.xlu0 %2081
    %v2084 = vmul.f32 %v2063, %v2082
    %v2086 = vcombine.high %v2057, %v2057
    %v2088 = vunpack.c.l.s4 1966171168
    %v2089 = vunpack.c.0.s8 %v2088
    %v2090 = vlaneseq
    %v2091 = vshrl.u32 %v2090, 7
    %v2092 = vsub.s32 %v2089, %v2091
    %v2093 = vrot.slane %v2086, %v2092
    %v2094 = vcombine.high %v2093, %v2093
    %v2096 = vunpack.c.l.s4 1966171168
    %v2097 = vunpack.c.0.s8 %v2096
    %v2098 = vlaneseq
    %v2099 = vshrl.u32 %v2098, 7
    %v2100 = vsub.s32 %v2097, %v2099
    %v2101 = vrot.slane %v2093, %v2100
    %v2103 = vunpack.c.l.s4 1966171168
    %v2104 = vunpack.c.0.s8 %v2103
    %v2105 = vlaneseq
    %v2106 = vshrl.u32 %v2105, 7
    %v2107 = vsub.s32 %v2104, %v2106
    %v2108 = vrot.slane %v2094, %v2107
    %v2109 = vlaneseq
    %v2110 = vshrl.u32 %v2109, 7
    %v2111 = vsub.s32 0, %v2110
    %v2112 = vrot.slane %v2101, %v2111
    %v2113 = vlaneseq
    %v2114 = vshrl.u32 %v2113, 7
    %v2115 = vsub.s32 0, %v2114
    %v2116 = vrot.slane %v2108, %v2115
    %2117 = vrot.lane.b32.xlu0 %v2112, 32
    %v2118 = vpop.permute.xlu0 %2117
    %2119 = vrot.lane.b32.xlu0 %v2116, 32
    %v2120 = vpop.permute.xlu0 %2119
    %2123 = vst.msk [vmem:[#allocation2 + $0x6] sm:$0x1] %vm371, %v2118
    %2124 = vst.msk [vmem:[#allocation2 + $0xe] sm:$0x1] %vm371, %v2120
    %v2127 = vunpack.c.l.s4 1966171168
    %v2128 = vunpack.c.0.s8 %v2127
    %v2129 = vlaneseq
    %v2130 = vshrl.u32 %v2129, 7
    %v2131 = vsub.s32 %v2128, %v2130
    %v2132 = vrot.slane %v2084, %v2131
    %v2133 = vcombine.high %v2132, %v2132
    %v2135 = vunpack.c.l.s4 1966171168
    %v2136 = vunpack.c.0.s8 %v2135
    %v2137 = vlaneseq
    %v2138 = vshrl.u32 %v2137, 7
    %v2139 = vsub.s32 %v2136, %v2138
    %v2140 = vrot.slane %v2132, %v2139
    %v2142 = vunpack.c.l.s4 1966171168
    %v2143 = vunpack.c.0.s8 %v2142
    %v2144 = vlaneseq
    %v2145 = vshrl.u32 %v2144, 7
    %v2146 = vsub.s32 %v2143, %v2145
    %v2147 = vrot.slane %v2133, %v2146
    %v2148 = vcombine.high %v2140, %v2140
    %v2149 = vcombine.high %v2147, %v2147
    %v2150 = vlaneseq
    %v2151 = vshrl.u32 %v2150, 7
    %v2152 = vsub.s32 0, %v2151
    %v2153 = vrot.slane %v2148, %v2152
    %v2154 = vlaneseq
    %v2155 = vshrl.u32 %v2154, 7
    %v2156 = vsub.s32 0, %v2155
    %v2157 = vrot.slane %v2149, %v2156
    %2158 = vrot.lane.b32.xlu0 %v2153, 64
    %v2159 = vpop.permute.xlu0 %2158
    %2160 = vrot.lane.b32.xlu0 %v2157, 64
    %v2161 = vpop.permute.xlu0 %2160
    %2164 = vst.msk [vmem:[#allocation2 + $0x1] sm:$0x1] %vm414, %v2159
    %2165 = vst.msk [vmem:[#allocation2 + $0x9] sm:$0x1] %vm414, %v2161
    %v2166 = vrot.slane %v2057, 4
    %2167 = vrot.lane.b32.xlu0 %v2166, 32
    %v2168 = vpop.permute.xlu0 %2167
    %v2169 = vsel %vm46, %v2168, 0
    %2171 = vmatprep.subr.mxu0 0.0
    %2172 = vmatpush1.msra.mxu0 %v130
    %2173 = vmatprep.subr.mxu0 0.0
    %2174 = vmatpush1.msra.mxu0 %v131
    %2175 = vmatprep.subr.mxu0 0.0
    %2176 = vmatpush1.msra.mxu0 %v132
    %2177 = vmatprep.subr.mxu0 0.0
    %2178 = vmatpush1.msra.mxu0 %v133
    %2179 = vmatprep.subr.mxu0 0.0
    %2180 = vmatpush1.msra.mxu0 0.0
    %2181 = vmatprep.subr.mxu0 0.0
    %2182 = vmatpush1.msra.mxu0 0.0
    %2183 = vmatprep.subr.mxu0 0.0
    %2184 = vmatpush1.msra.mxu0 0.0
    %2185 = vmatprep.subr.mxu0 0.0
    %2186 = vmatpush1.msra.mxu0 0.0
    %2187 = vmatprep.subr.mxu0 0.0
    %2188 = vmatpush1.msra.mxu0 0.0
    %2189 = vmatprep.subr.mxu0 0.0
    %2190 = vmatpush1.msra.mxu0 0.0
    %2191 = vmatprep.subr.mxu0 0.0
    %2192 = vmatpush1.msra.mxu0 0.0
    %2193 = vmatprep.subr.mxu0 0.0
    %2194 = vmatpush1.msra.mxu0 0.0
    %2195 = vmatprep.subr.mxu0 0.0
    %2196 = vmatpush1.msra.mxu0 0.0
    %2197 = vmatprep.subr.mxu0 0.0
    %2198 = vmatpush1.msra.mxu0 0.0
    %2199 = vmatprep.subr.mxu0 0.0
    %2200 = vmatpush1.msra.mxu0 0.0
    %2201 = vmatprep.subr.mxu0 0.0
    %2202 = vmatpush1.msra.mxu0 0.0
    %2203 = vmatprep.subr.mxu0 0.0
    %2204 = vmatpush1.msra.mxu0 0.0
    %2205 = vmatprep.subr.mxu0 0.0
    %2206 = vmatpush1.msra.mxu0 0.0
    %2207 = vmatprep.subr.mxu0 0.0
    %2208 = vmatpush1.msra.mxu0 0.0
    %2209 = vmatprep.subr.mxu0 0.0
    %2210 = vmatpush1.msra.mxu0 0.0
    %2211 = vmatprep.subr.mxu0 0.0
    %2212 = vmatpush1.msra.mxu0 0.0
    %2213 = vmatprep.subr.mxu0 0.0
    %2214 = vmatpush1.msra.mxu0 0.0
    %2215 = vmatprep.subr.mxu0 0.0
    %2216 = vmatpush1.msra.mxu0 0.0
    %2217 = vmatprep.subr.mxu0 0.0
    %2218 = vmatpush1.msra.mxu0 0.0
    %2219 = vmatprep.subr.mxu0 0.0
    %2220 = vmatpush1.msra.mxu0 0.0
    %2221 = vmatprep.subr.mxu0 0.0
    %2222 = vmatpush1.msra.mxu0 0.0
    %2223 = vmatprep.subr.mxu0 0.0
    %2224 = vmatpush1.msra.mxu0 0.0
    %2225 = vmatprep.subr.mxu0 0.0
    %2226 = vmatpush1.msra.mxu0 0.0
    %2227 = vmatprep.subr.mxu0 0.0
    %2228 = vmatpush1.msra.mxu0 0.0
    %2229 = vmatprep.subr.mxu0 0.0
    %2230 = vmatpush1.msra.mxu0 0.0
    %2231 = vmatprep.subr.mxu0 0.0
    %2232 = vmatpush1.msra.mxu0 0.0
    %2233 = vmatprep.subr.mxu0 0.0
    %2234 = vmatpush1.msra.mxu0 0.0
    %2235 = vmatprep.mubr.f32.mxu0 0.0
    %2236 = vmatmul.mubr.f32.gmra.mrb[0].mxu0 %v2169
    %v2237 = vpop.f32.mrb[0].mxu0
    %v2238 = vadd.f32 0.0, %v2237
    %v2239 = vpop.f32.mrb[0].mxu0
    %2240 = vdwg.mxu0
    %v2242 = vrot.slane %v2238, 2
    %v2244 = vadd.f32 %v126, %v2242
    %v2245 = vrot.slane %v2084, 2
    %2246 = vrot.lane.b32.xlu0 %v2245, 32
    %v2247 = vpop.permute.xlu0 %2246
    %v2248 = vsel %vm46, %v2247, 0
    %2250 = vmatprep.subr.mxu0 0.0
    %2251 = vmatpush1.msra.mxu0 %v134
    %2252 = vmatprep.subr.mxu0 0.0
    %2253 = vmatpush1.msra.mxu0 %v135
    %2254 = vmatprep.subr.mxu0 0.0
    %2255 = vmatpush1.msra.mxu0 %v136
    %2256 = vmatprep.subr.mxu0 0.0
    %2257 = vmatpush1.msra.mxu0 %v137
    %2258 = vmatprep.subr.mxu0 0.0
    %2259 = vmatpush1.msra.mxu0 0.0
    %2260 = vmatprep.subr.mxu0 0.0
    %2261 = vmatpush1.msra.mxu0 0.0
    %2262 = vmatprep.subr.mxu0 0.0
    %2263 = vmatpush1.msra.mxu0 0.0
    %2264 = vmatprep.subr.mxu0 0.0
    %2265 = vmatpush1.msra.mxu0 0.0
    %2266 = vmatprep.subr.mxu0 0.0
    %2267 = vmatpush1.msra.mxu0 0.0
    %2268 = vmatprep.subr.mxu0 0.0
    %2269 = vmatpush1.msra.mxu0 0.0
    %2270 = vmatprep.subr.mxu0 0.0
    %2271 = vmatpush1.msra.mxu0 0.0
    %2272 = vmatprep.subr.mxu0 0.0
    %2273 = vmatpush1.msra.mxu0 0.0
    %2274 = vmatprep.subr.mxu0 0.0
    %2275 = vmatpush1.msra.mxu0 0.0
    %2276 = vmatprep.subr.mxu0 0.0
    %2277 = vmatpush1.msra.mxu0 0.0
    %2278 = vmatprep.subr.mxu0 0.0
    %2279 = vmatpush1.msra.mxu0 0.0
    %2280 = vmatprep.subr.mxu0 0.0
    %2281 = vmatpush1.msra.mxu0 0.0
    %2282 = vmatprep.subr.mxu0 0.0
    %2283 = vmatpush1.msra.mxu0 0.0
    %2284 = vmatprep.subr.mxu0 0.0
    %2285 = vmatpush1.msra.mxu0 0.0
    %2286 = vmatprep.subr.mxu0 0.0
    %2287 = vmatpush1.msra.mxu0 0.0
    %2288 = vmatprep.subr.mxu0 0.0
    %2289 = vmatpush1.msra.mxu0 0.0
    %2290 = vmatprep.subr.mxu0 0.0
    %2291 = vmatpush1.msra.mxu0 0.0
    %2292 = vmatprep.subr.mxu0 0.0
    %2293 = vmatpush1.msra.mxu0 0.0
    %2294 = vmatprep.subr.mxu0 0.0
    %2295 = vmatpush1.msra.mxu0 0.0
    %2296 = vmatprep.subr.mxu0 0.0
    %2297 = vmatpush1.msra.mxu0 0.0
    %2298 = vmatprep.subr.mxu0 0.0
    %2299 = vmatpush1.msra.mxu0 0.0
    %2300 = vmatprep.subr.mxu0 0.0
    %2301 = vmatpush1.msra.mxu0 0.0
    %2302 = vmatprep.subr.mxu0 0.0
    %2303 = vmatpush1.msra.mxu0 0.0
    %2304 = vmatprep.subr.mxu0 0.0
    %2305 = vmatpush1.msra.mxu0 0.0
    %2306 = vmatprep.subr.mxu0 0.0
    %2307 = vmatpush1.msra.mxu0 0.0
    %2308 = vmatprep.subr.mxu0 0.0
    %2309 = vmatpush1.msra.mxu0 0.0
    %2310 = vmatprep.subr.mxu0 0.0
    %2311 = vmatpush1.msra.mxu0 0.0
    %2312 = vmatprep.subr.mxu0 0.0
    %2313 = vmatpush1.msra.mxu0 0.0
    %2314 = vmatprep.mubr.f32.mxu0 0.0
    %2315 = vmatmul.mubr.f32.gmra.mrb[0].mxu0 %v2248
    %v2316 = vpop.f32.mrb[0].mxu0
    %v2317 = vadd.f32 0.0, %v2316
    %v2318 = vpop.f32.mrb[0].mxu0
    %2319 = vdwg.mxu0
    %v2320 = vadd.f32 %v122, %v2317
    %v2321 = vxor.u32 %v2244, 2147483648
    %v2322 = vmul.f32 %v2321, 1.442695
    %v2323 = vpow.pop %v2322
    %v2324 = vadd.f32 %v2323, 1.0
    %v2325 = vrcp.pop %v2324
    %v2326 = vmul.f32 1.0, %v2325
    %v2327 = vtanh.pop %v2244
    %v2329 = vrot.slane %v2051, 6
    %v2331 = vmul.f32 %v2326, %v2329
    %2333 = vrot.lane.b32.xlu0 %v2327, 64
    %v2334 = vpop.permute.xlu0 %2333
    %v2336 = vmul.f32 %v2326, %v2334
    %2338 = vrot.lane.b32.xlu0 %v2336, 32
    %v2339 = vpop.permute.xlu0 %2338
    %v2341 = vadd.f32 %v2331, %v2339
    %v2342 = vtanh.pop %v2341
    %2344 = vrot.lane.b32.xlu0 %v2342, 64
    %v2345 = vpop.permute.xlu0 %2344
    %v2347 = vmul.f32 %v2326, %v2345
    %v2348 = vxor.u32 %v2320, 2147483648
    %v2349 = vmul.f32 %v2348, 1.442695
    %v2350 = vpow.pop %v2349
    %v2351 = vadd.f32 %v2350, 1.0
    %v2352 = vrcp.pop %v2351
    %v2353 = vmul.f32 1.0, %v2352
    %v2354 = vtanh.pop %v2320
    %v2356 = vrot.slane %v2078, 2
    %v2358 = vmul.f32 %v2353, %v2356
    %2360 = vrot.lane.b32.xlu0 %v2354, 64
    %v2361 = vpop.permute.xlu0 %2360
    %v2363 = vmul.f32 %v2353, %v2361
    %2365 = vrot.lane.b32.xlu0 %v2363, 32
    %v2366 = vpop.permute.xlu0 %2365
    %v2368 = vadd.f32 %v2358, %v2366
    %v2369 = vtanh.pop %v2368
    %2371 = vrot.lane.b32.xlu0 %v2369, 64
    %v2372 = vpop.permute.xlu0 %2371
    %v2374 = vmul.f32 %v2353, %v2372
    %v2376 = vcombine.high %v2347, %v2347
    %v2378 = vunpack.c.l.s4 1966171168
    %v2379 = vunpack.c.0.s8 %v2378
    %v2380 = vlaneseq
    %v2381 = vshrl.u32 %v2380, 7
    %v2382 = vsub.s32 %v2379, %v2381
    %v2383 = vrot.slane %v2376, %v2382
    %v2384 = vcombine.high %v2383, %v2383
    %v2386 = vunpack.c.l.s4 1966171168
    %v2387 = vunpack.c.0.s8 %v2386
    %v2388 = vlaneseq
    %v2389 = vshrl.u32 %v2388, 7
    %v2390 = vsub.s32 %v2387, %v2389
    %v2391 = vrot.slane %v2383, %v2390
    %v2393 = vunpack.c.l.s4 1966171168
    %v2394 = vunpack.c.0.s8 %v2393
    %v2395 = vlaneseq
    %v2396 = vshrl.u32 %v2395, 7
    %v2397 = vsub.s32 %v2394, %v2396
    %v2398 = vrot.slane %v2384, %v2397
    %v2399 = vcombine.high %v2391, %v2391
    %v2400 = vcombine.high %v2398, %v2398
    %v2401 = vlaneseq
    %v2402 = vshrl.u32 %v2401, 7
    %v2403 = vsub.s32 0, %v2402
    %v2404 = vrot.slane %v2399, %v2403
    %v2405 = vlaneseq
    %v2406 = vshrl.u32 %v2405, 7
    %v2407 = vsub.s32 0, %v2406
    %v2408 = vrot.slane %v2400, %v2407
    %2409 = vrot.lane.b32.xlu0 %v2404, 32
    %v2410 = vpop.permute.xlu0 %2409
    %2411 = vrot.lane.b32.xlu0 %v2408, 32
    %v2412 = vpop.permute.xlu0 %2411
    %2415 = vst.msk [vmem:[#allocation2 + $0x7] sm:$0x1] %vm371, %v2410
    %2416 = vst.msk [vmem:[#allocation2 + $0xf] sm:$0x1] %vm371, %v2412
    %v2419 = vunpack.c.l.s4 1966171168
    %v2420 = vunpack.c.0.s8 %v2419
    %v2421 = vlaneseq
    %v2422 = vshrl.u32 %v2421, 7
    %v2423 = vsub.s32 %v2420, %v2422
    %v2424 = vrot.slane %v2374, %v2423
    %v2425 = vcombine.high %v2424, %v2424
    %v2427 = vunpack.c.l.s4 1966171168
    %v2428 = vunpack.c.0.s8 %v2427
    %v2429 = vlaneseq
    %v2430 = vshrl.u32 %v2429, 7
    %v2431 = vsub.s32 %v2428, %v2430
    %v2432 = vrot.slane %v2424, %v2431
    %v2434 = vunpack.c.l.s4 1966171168
    %v2435 = vunpack.c.0.s8 %v2434
    %v2436 = vlaneseq
    %v2437 = vshrl.u32 %v2436, 7
    %v2438 = vsub.s32 %v2435, %v2437
    %v2439 = vrot.slane %v2425, %v2438
    %v2440 = vlaneseq
    %v2441 = vshrl.u32 %v2440, 7
    %v2442 = vsub.s32 0, %v2441
    %v2443 = vrot.slane %v2432, %v2442
    %v2444 = vlaneseq
    %v2445 = vshrl.u32 %v2444, 7
    %v2446 = vsub.s32 0, %v2445
    %v2447 = vrot.slane %v2439, %v2446
    %2448 = vrot.lane.b32.xlu0 %v2443, 64
    %v2449 = vpop.permute.xlu0 %2448
    %2450 = vrot.lane.b32.xlu0 %v2447, 64
    %v2451 = vpop.permute.xlu0 %2450
    %2454 = vst.msk [vmem:[#allocation2] sm:$0x1] %vm414, %v2449
    %2455 = vst.msk [vmem:[#allocation2 + $0x8] sm:$0x1] %vm414, %v2451
    %2456 = vrot.lane.b32.xlu0 %v2347, 32
    %v2457 = vpop.permute.xlu0 %2456
    %vm2459 = vcmask 261126
    %2460 = vst.msk [vmem:[#allocation4 - $0x6] sm:$0xc0] %vm2459, %v2457
    %2461 = vrot.lane.b32.xlu0 %v2374, 32
    %v2462 = vpop.permute.xlu0 %2461
    %s2464 = scalar_lea.vmem [#allocation4], 2
    %vm2465 = vcmask 254976
    %2466 = vst.msk [vmem:[%s2464] sm:$0x3] %vm2465, %v2462
    // Predicated region
    $region22: #{encoder_rnn_forward.1} parent=1 // pred_check
      _
    $region23: #{encoder_rnn_forward.1} parent=1 // pred_check_branch
      %2468 = sbr.rel (0) target = $region25
    $region24: #{encoder_rnn_forward.1} parent=1 // pred_region
      %s2470 = ssub.s32 256, 256
      %2471 = vsyncadd [#allocation3], %s2470
      %s2472 = sshll.u32 [#allocation2], 4
      %s2473 = int_to_ptr.vmem [resolvable:$true] %s2472
      %2478 = dma.vmem_to_hbm [thread:$0]  %s2473, 256, %s5, [#allocation3], 128, 128, 8
    $region25: #{encoder_rnn_forward.1} parent=1 // pred_fallthru
      _
    // Predicated region
    $region26: #{encoder_rnn_forward.1} parent=1 // pred_check
      _
    $region27: #{encoder_rnn_forward.1} parent=1 // pred_check_branch
      %2480 = sbr.rel (0) target = $region29
    $region28: #{encoder_rnn_forward.1} parent=1 // pred_region
      %s2482 = ssub.s32 64, 64
      %2483 = vsyncadd [#allocation5], %s2482
      %s2484 = sshll.u32 [#allocation4], 4
      %s2485 = int_to_ptr.vmem [resolvable:$true] %s2484
      %2490 = dma.vmem_to_hbm [thread:$0]  %s2485, 64, %s6, [#allocation5], 32, 32, 2
    $region29: #{encoder_rnn_forward.1} parent=1 // pred_fallthru
      _
    // Predicated region
    $region30: #{encoder_rnn_forward.1} parent=1 // pred_check
      _
    $region31: #{encoder_rnn_forward.1} parent=1 // pred_check_branch
      %2492 = sbr.rel (0) target = $region33
    $region32: #{encoder_rnn_forward.1} parent=1 // pred_region
      %2493 = dma.done [#allocation3], 256
    $region33: #{encoder_rnn_forward.1} parent=1 // pred_fallthru
      _
    // Predicated region
    $region34: #{encoder_rnn_forward.1} parent=1 // pred_check
      _
    $region35: #{encoder_rnn_forward.1} parent=1 // pred_check_branch
      %2495 = sbr.rel (0) target = $region37
    $region36: #{encoder_rnn_forward.1} parent=1 // pred_region
      %2496 = dma.done [#allocation5], 64
    $region37: #{encoder_rnn_forward.1} parent=1 // pred_fallthru
      _
    %2497 = vsyncpa [#allocation3], 1
    %2498 = vsyncpa [#allocation5], 1

</llo_original>
